<compile_context>
chip_gen: v6e
topology: v6e:2x2x1
jax: 0.10.0
libtpu: 0.0.40
codegen_flags: <defaults>
</compile_context>

<pallas_src>
import jax
import jax.numpy as jnp
from jax.experimental import pallas as pl
from jax.experimental.pallas import tpu as pltpu

N = 2          # batch
C = 768        # inception Mixed_6e output channels
H = W = 17     # spatial size before AvgPool2d(17)
D1 = 256       # dense1 out
D2 = 2048      # dense2 out


def _head_kernel(p_ref, w1_ref, b1_ref, w2_ref, b2_ref, o_ref):
    # p_ref : (N, C)   f32   pooled features
    # w1_ref: (C, D1)  bf16  (pre-transposed Linear weight)
    # b1_ref: (1, D1)  f32
    # w2_ref: (D1, D2) bf16
    # b2_ref: (1, D2)  f32
    pooled = p_ref[...]
    # dense1: (N, C) @ (C, D1) + b1  (bf16 operands, f32 accumulation)
    h = jnp.dot(pooled.astype(jnp.bfloat16), w1_ref[...],
                preferred_element_type=jnp.float32) + b1_ref[...]      # (N, D1) f32
    # dense2: (N, D1) @ (D1, D2) + b2
    out = jnp.dot(h.astype(jnp.bfloat16), w2_ref[...],
                  preferred_element_type=jnp.float32) + b2_ref[...]    # (N, D2) f32
    o_ref[...] = out.astype(o_ref.dtype)


def prepare_params(w1, b1, w2, b2):
    """One-time (load-time) parameter prep: transpose to (in, out), cast to bf16."""
    w1_t = jnp.transpose(w1).astype(jnp.bfloat16)       # (768, 256)
    w2_t = jnp.transpose(w2).astype(jnp.bfloat16)       # (256, 2048)
    b1_2d = b1.reshape(1, D1).astype(jnp.float32)
    b2_2d = b2.reshape(1, D2).astype(jnp.float32)
    return w1_t, b1_2d, w2_t, b2_2d


def style_predict_head(features_nchw, w1_t, b1_2d, w2_t, b2_2d):
    """features_nchw: (N, 768, 17, 17) -> (N, 2048)."""
    n, c, h, w = features_nchw.shape
    assert (c, h, w) == (C, H, W)
    # AvgPool2d(17) + Flatten done in XLA on the native NCHW layout; avoids a
    # costly transpose and shrinks the kernel's input to (N, 768).
    pooled = jnp.mean(features_nchw, axis=(2, 3))        # (N, 768) f32

    vmem = pl.BlockSpec(memory_space=pltpu.MemorySpace.VMEM)
    return pl.pallas_call(
        _head_kernel,
        out_shape=jax.ShapeDtypeStruct((n, D2), jnp.float32),
        in_specs=[vmem, vmem, vmem, vmem, vmem],
        out_specs=vmem,
    )(pooled, w1_t, b1_2d, w2_t, b2_2d)


def _reference(features_nchw, w1, b1, w2, b2):
    pooled = jnp.mean(features_nchw, axis=(2, 3))        # AvgPool2d(17) + Flatten
    h = pooled @ w1.T + b1
    return h @ w2.T + b2


if __name__ == "__main__":
    key = jax.random.PRNGKey(0)
    kf, k1, kb1, k2, kb2 = jax.random.split(key, 5)

    # Stand-in for the inception_v3 feature map (backbone not translated, see TODO).
    features = jax.random.normal(kf, (N, C, H, W), dtype=jnp.float32)

    # Deterministic parameter init (PyTorch Linear shapes: (out, in) and (out,)).
    w1 = jax.random.normal(k1, (D1, C), dtype=jnp.float32) * (1.0 / jnp.sqrt(C))
    b1 = jax.random.normal(kb1, (D1,), dtype=jnp.float32) * 0.01
    w2 = jax.random.normal(k2, (D2, D1), dtype=jnp.float32) * (1.0 / jnp.sqrt(D1))
    b2 = jax.random.normal(kb2, (D2,), dtype=jnp.float32) * 0.01

    # Load-time prep (transpose + bf16 cast happens once, not per call).
    params = prepare_params(w1, b1, w2, b2)
    params = jax.tree_util.tree_map(jax.block_until_ready, params)

    fwd = jax.jit(style_predict_head)
    out = fwd(features, *params)
    out = jax.block_until_ready(out)
    assert out.shape == (N, D2), out.shape

    # f32 reference; bf16 weight streaming introduces small (<1e-2) drift.
    ref = _reference(features, w1, b1, w2, b2)
    assert jnp.allclose(out, ref, atol=2e-2, rtol=2e-2), "mismatch vs reference"

    print("KERNEL_OK")
</pallas_src>

<mosaic_0001>
module attributes {stable_mosaic.version = 11 : i64} {
  func.func @_head_kernel(%arg0: memref<2x768xf32, #tpu.memory_space<vmem>>, %arg1: memref<768x256xbf16, #tpu.memory_space<vmem>>, %arg2: memref<1x256xf32, #tpu.memory_space<vmem>>, %arg3: memref<256x2048xbf16, #tpu.memory_space<vmem>>, %arg4: memref<1x2048xf32, #tpu.memory_space<vmem>>, %arg5: memref<2x2048xf32, #tpu.memory_space<vmem>>) attributes {dimension_semantics = [], scalar_prefetch = 0 : i64, scratch_operands = 0 : i64, tpu.core_type = #tpu.core_type<tc>} {
    %c0 = arith.constant 0 : index
    %c0_0 = arith.constant 0 : index
    %0 = vector.load %arg0[%c0, %c0_0] : memref<2x768xf32, #tpu.memory_space<vmem>>, vector<2x768xf32>
    %1 = arith.truncf %0 : vector<2x768xf32> to vector<2x768xbf16>
    %c0_1 = arith.constant 0 : index
    %c0_2 = arith.constant 0 : index
    %2 = vector.load %arg1[%c0_1, %c0_2] : memref<768x256xbf16, #tpu.memory_space<vmem>>, vector<768x256xbf16>
    %cst = arith.constant dense<0.000000e+00> : vector<2x256xf32>
    %3 = tpu.matmul %1, %2, %cst {dimension_numbers = #tpu.dot_dimension_numbers<[1], [0], [0], [1], [0, 0, 1, 1], [], []>} : vector<2x768xbf16>, vector<768x256xbf16>, vector<2x256xf32> -> vector<2x256xf32>
    %c0_3 = arith.constant 0 : index
    %c0_4 = arith.constant 0 : index
    %4 = vector.load %arg2[%c0_3, %c0_4] : memref<1x256xf32, #tpu.memory_space<vmem>>, vector<1x256xf32>
    %5 = vector.broadcast %4 : vector<1x256xf32> to vector<2x256xf32>
    %6 = arith.addf %3, %5 : vector<2x256xf32>
    %7 = arith.truncf %6 : vector<2x256xf32> to vector<2x256xbf16>
    %c0_5 = arith.constant 0 : index
    %c0_6 = arith.constant 0 : index
    %8 = vector.load %arg3[%c0_5, %c0_6] : memref<256x2048xbf16, #tpu.memory_space<vmem>>, vector<256x2048xbf16>
    %cst_7 = arith.constant dense<0.000000e+00> : vector<2x2048xf32>
    %9 = tpu.matmul %7, %8, %cst_7 {dimension_numbers = #tpu.dot_dimension_numbers<[1], [0], [0], [1], [0, 0, 1, 1], [], []>} : vector<2x256xbf16>, vector<256x2048xbf16>, vector<2x2048xf32> -> vector<2x2048xf32>
    %c0_8 = arith.constant 0 : index
    %c0_9 = arith.constant 0 : index
    %10 = vector.load %arg4[%c0_8, %c0_9] : memref<1x2048xf32, #tpu.memory_space<vmem>>, vector<1x2048xf32>
    %11 = vector.broadcast %10 : vector<1x2048xf32> to vector<2x2048xf32>
    %12 = arith.addf %9, %11 : vector<2x2048xf32>
    %c0_10 = arith.constant 0 : index
    %c0_11 = arith.constant 0 : index
    %13 = vector.load %arg5[%c0_10, %c0_11] : memref<2x2048xf32, #tpu.memory_space<vmem>>, vector<2x2048xf32>
    tpu.vector_store %arg5[%c0_10, %c0_11], %12 {strides = array<i32>} : memref<2x2048xf32, #tpu.memory_space<vmem>>, vector<2x2048xf32>,
    return
  }
}

</mosaic_0001>

<llo_original>
// kernel: style_predict_head.1
$region0: #{style_predict_head.1}
  #allocation0 [shape = 'u32[]', space=smem, size = 0x4, offset = 0x4, fixed_abs, tag = 'smem constant byte address 0x4 - core index']
  #allocation1 [shape = 'u32[144,128]{1,0:T(1,128)}', space=vmem, size = 0x12000, scoped, tag = 'internal scratch']
  %s0 = inlined_call_operand.vmem [shape: f32[2,768], index: 0, kind: input, shape index: {}]
  %s1 = inlined_call_operand.vmem [shape: bf16[768,256], index: 1, kind: input, shape index: {}]
  %s2 = inlined_call_operand.vmem [shape: f32[1,256], index: 2, kind: input, shape index: {}]
  %s3 = inlined_call_operand.vmem [shape: bf16[256,2048], index: 3, kind: input, shape index: {}]
  %s4 = inlined_call_operand.vmem [shape: f32[1,2048], index: 4, kind: input, shape index: {}]
  %s5 = inlined_call_operand.hbm [shape: f32[2,2048], index: 5, kind: output, shape index: {}]
  %s6 = sld [smem:[#allocation0]]
  $region30: #{style_predict_head.1} parent=0
    _
  %s8 = ssub.s32 1, %s6
  %s9 = scalar_select 0, %s8, %s6
  $region1: #{style_predict_head.1} parent=0
    #allocation2 [shape = 'u8[16384]{0}', space=vmem, size = 0x4000, scoped, tag = 'output window, operand 0, single buffered']
    #allocation3 [shape = 's32[1]{0}', space=sflag, size = 0x4, scoped, tag = 'scoped memory for style_predict_head.1']
    %10 = vsyncpa [#allocation3], 0
    // Predicated region
    $region2: #{style_predict_head.1} parent=1 // pred_check
      _
    $region3: #{style_predict_head.1} parent=1 // pred_check_branch
      %12 = sbr.rel (0) target = $region5
    $region4: #{style_predict_head.1} parent=1 // pred_region
      _
    $region5: #{style_predict_head.1} parent=1 // pred_fallthru
      _
    // Predicated region
    $region6: #{style_predict_head.1} parent=1 // pred_check
      _
    $region7: #{style_predict_head.1} parent=1 // pred_check_branch
      %14 = sbr.rel (0) target = $region9
    $region8: #{style_predict_head.1} parent=1 // pred_region
      _
    $region9: #{style_predict_head.1} parent=1 // pred_fallthru
      _
    // Predicated region
    $region10: #{style_predict_head.1} parent=1 // pred_check
      _
    $region11: #{style_predict_head.1} parent=1 // pred_check_branch
      %16 = sbr.rel (0) target = $region13
    $region12: #{style_predict_head.1} parent=1 // pred_region
      _
    $region13: #{style_predict_head.1} parent=1 // pred_fallthru
      _
    // Predicated region
    $region14: #{style_predict_head.1} parent=1 // pred_check
      _
    $region15: #{style_predict_head.1} parent=1 // pred_check_branch
      %18 = sbr.rel (0) target = $region17
    $region16: #{style_predict_head.1} parent=1 // pred_region
      _
    $region17: #{style_predict_head.1} parent=1 // pred_fallthru
      _
    // Predicated region
    $region18: #{style_predict_head.1} parent=1 // pred_check
      _
    $region19: #{style_predict_head.1} parent=1 // pred_check_branch
      %20 = sbr.rel (0) target = $region21
    $region20: #{style_predict_head.1} parent=1 // pred_region
      _
    $region21: #{style_predict_head.1} parent=1 // pred_fallthru
      _
    %v21 = vld [vmem:[%s0] sm:$0xff]
    %v22 = vld [vmem:[%s0 + $0x8] sm:$0xf]
    %v25 = vcombine.high %v21, %v21
    %v27 = vunpack.c.l.s4 1983009808
    %v28 = vunpack.c.0.s8 %v27
    %v29 = vlaneseq
    %v30 = vshrl.u32 %v29, 7
    %v31 = vsub.s32 %v28, %v30
    %v32 = vrot.slane %v21, %v31
    %v34 = vunpack.c.l.s4 1983009808
    %v35 = vunpack.c.0.s8 %v34
    %v36 = vlaneseq
    %v37 = vshrl.u32 %v36, 7
    %v38 = vsub.s32 %v35, %v37
    %v39 = vrot.slane %v25, %v38
    %v40 = vcombine.high %v32, %v32
    %v41 = vcombine.high %v39, %v39
    %v43 = vunpack.c.l.s4 1983009808
    %v44 = vunpack.c.0.s8 %v43
    %v45 = vlaneseq
    %v46 = vshrl.u32 %v45, 7
    %v47 = vsub.s32 %v44, %v46
    %v48 = vrot.slane %v22, %v47
    %v49 = vcombine.high %v48, %v48
    %v56 = vpack.c.bf16 %v32, %v32
    %v57 = vpack.c.bf16 %v40, %v40
    %v58 = vpack.c.bf16 %v39, %v39
    %v59 = vpack.c.bf16 %v41, %v41
    %v60 = vpack.c.bf16 %v48, %v48
    %v61 = vpack.c.bf16 %v49, %v49
    %v62 = vld [vmem:[%s1] sm:$0xff]
    %v63 = vld [vmem:[%s1 + $0x8] sm:$0xff]
    %v64 = vld [vmem:[%s1 + $0x10] sm:$0xff]
    %v65 = vld [vmem:[%s1 + $0x18] sm:$0xff]
    %v66 = vld [vmem:[%s1 + $0x20] sm:$0xff]
    %v67 = vld [vmem:[%s1 + $0x28] sm:$0xff]
    %v68 = vld [vmem:[%s1 + $0x30] sm:$0xff]
    %v69 = vld [vmem:[%s1 + $0x38] sm:$0xff]
    %v70 = vld [vmem:[%s1 + $0x40] sm:$0xff]
    %v71 = vld [vmem:[%s1 + $0x48] sm:$0xff]
    %v72 = vld [vmem:[%s1 + $0x50] sm:$0xff]
    %v73 = vld [vmem:[%s1 + $0x58] sm:$0xff]
    %v74 = vld [vmem:[%s1 + $0x60] sm:$0xff]
    %v75 = vld [vmem:[%s1 + $0x68] sm:$0xff]
    %v76 = vld [vmem:[%s1 + $0x70] sm:$0xff]
    %v77 = vld [vmem:[%s1 + $0x78] sm:$0xff]
    %v78 = vld [vmem:[%s1 + $0x80] sm:$0xff]
    %v79 = vld [vmem:[%s1 + $0x88] sm:$0xff]
    %v80 = vld [vmem:[%s1 + $0x90] sm:$0xff]
    %v81 = vld [vmem:[%s1 + $0x98] sm:$0xff]
    %v82 = vld [vmem:[%s1 + $0xa0] sm:$0xff]
    %v83 = vld [vmem:[%s1 + $0xa8] sm:$0xff]
    %v84 = vld [vmem:[%s1 + $0xb0] sm:$0xff]
    %v85 = vld [vmem:[%s1 + $0xb8] sm:$0xff]
    %v86 = vld [vmem:[%s1 + $0xc0] sm:$0xff]
    %v87 = vld [vmem:[%s1 + $0xc8] sm:$0xff]
    %v88 = vld [vmem:[%s1 + $0xd0] sm:$0xff]
    %v89 = vld [vmem:[%s1 + $0xd8] sm:$0xff]
    %v90 = vld [vmem:[%s1 + $0xe0] sm:$0xff]
    %v91 = vld [vmem:[%s1 + $0xe8] sm:$0xff]
    %v92 = vld [vmem:[%s1 + $0xf0] sm:$0xff]
    %v93 = vld [vmem:[%s1 + $0xf8] sm:$0xff]
    %v94 = vld [vmem:[%s1 + $0x100] sm:$0xff]
    %v95 = vld [vmem:[%s1 + $0x108] sm:$0xff]
    %v96 = vld [vmem:[%s1 + $0x110] sm:$0xff]
    %v97 = vld [vmem:[%s1 + $0x118] sm:$0xff]
    %v98 = vld [vmem:[%s1 + $0x120] sm:$0xff]
    %v99 = vld [vmem:[%s1 + $0x128] sm:$0xff]
    %v100 = vld [vmem:[%s1 + $0x130] sm:$0xff]
    %v101 = vld [vmem:[%s1 + $0x138] sm:$0xff]
    %v102 = vld [vmem:[%s1 + $0x140] sm:$0xff]
    %v103 = vld [vmem:[%s1 + $0x148] sm:$0xff]
    %v104 = vld [vmem:[%s1 + $0x150] sm:$0xff]
    %v105 = vld [vmem:[%s1 + $0x158] sm:$0xff]
    %v106 = vld [vmem:[%s1 + $0x160] sm:$0xff]
    %v107 = vld [vmem:[%s1 + $0x168] sm:$0xff]
    %v108 = vld [vmem:[%s1 + $0x170] sm:$0xff]
    %v109 = vld [vmem:[%s1 + $0x178] sm:$0xff]
    %v110 = vld [vmem:[%s1 + $0x180] sm:$0xff]
    %v111 = vld [vmem:[%s1 + $0x188] sm:$0xff]
    %v112 = vld [vmem:[%s1 + $0x190] sm:$0xff]
    %v113 = vld [vmem:[%s1 + $0x198] sm:$0xff]
    %v114 = vld [vmem:[%s1 + $0x1a0] sm:$0xff]
    %v115 = vld [vmem:[%s1 + $0x1a8] sm:$0xff]
    %v116 = vld [vmem:[%s1 + $0x1b0] sm:$0xff]
    %v117 = vld [vmem:[%s1 + $0x1b8] sm:$0xff]
    %v118 = vld [vmem:[%s1 + $0x1c0] sm:$0xff]
    %v119 = vld [vmem:[%s1 + $0x1c8] sm:$0xff]
    %v120 = vld [vmem:[%s1 + $0x1d0] sm:$0xff]
    %v121 = vld [vmem:[%s1 + $0x1d8] sm:$0xff]
    %v122 = vld [vmem:[%s1 + $0x1e0] sm:$0xff]
    %v123 = vld [vmem:[%s1 + $0x1e8] sm:$0xff]
    %v124 = vld [vmem:[%s1 + $0x1f0] sm:$0xff]
    %v125 = vld [vmem:[%s1 + $0x1f8] sm:$0xff]
    %v126 = vld [vmem:[%s1 + $0x200] sm:$0xff]
    %v127 = vld [vmem:[%s1 + $0x208] sm:$0xff]
    %v128 = vld [vmem:[%s1 + $0x210] sm:$0xff]
    %v129 = vld [vmem:[%s1 + $0x218] sm:$0xff]
    %v130 = vld [vmem:[%s1 + $0x220] sm:$0xff]
    %v131 = vld [vmem:[%s1 + $0x228] sm:$0xff]
    %v132 = vld [vmem:[%s1 + $0x230] sm:$0xff]
    %v133 = vld [vmem:[%s1 + $0x238] sm:$0xff]
    %v134 = vld [vmem:[%s1 + $0x240] sm:$0xff]
    %v135 = vld [vmem:[%s1 + $0x248] sm:$0xff]
    %v136 = vld [vmem:[%s1 + $0x250] sm:$0xff]
    %v137 = vld [vmem:[%s1 + $0x258] sm:$0xff]
    %v138 = vld [vmem:[%s1 + $0x260] sm:$0xff]
    %v139 = vld [vmem:[%s1 + $0x268] sm:$0xff]
    %v140 = vld [vmem:[%s1 + $0x270] sm:$0xff]
    %v141 = vld [vmem:[%s1 + $0x278] sm:$0xff]
    %v142 = vld [vmem:[%s1 + $0x280] sm:$0xff]
    %v143 = vld [vmem:[%s1 + $0x288] sm:$0xff]
    %v144 = vld [vmem:[%s1 + $0x290] sm:$0xff]
    %v145 = vld [vmem:[%s1 + $0x298] sm:$0xff]
    %v146 = vld [vmem:[%s1 + $0x2a0] sm:$0xff]
    %v147 = vld [vmem:[%s1 + $0x2a8] sm:$0xff]
    %v148 = vld [vmem:[%s1 + $0x2b0] sm:$0xff]
    %v149 = vld [vmem:[%s1 + $0x2b8] sm:$0xff]
    %v150 = vld [vmem:[%s1 + $0x2c0] sm:$0xff]
    %v151 = vld [vmem:[%s1 + $0x2c8] sm:$0xff]
    %v152 = vld [vmem:[%s1 + $0x2d0] sm:$0xff]
    %v153 = vld [vmem:[%s1 + $0x2d8] sm:$0xff]
    %v154 = vld [vmem:[%s1 + $0x2e0] sm:$0xff]
    %v155 = vld [vmem:[%s1 + $0x2e8] sm:$0xff]
    %v156 = vld [vmem:[%s1 + $0x2f0] sm:$0xff]
    %v157 = vld [vmem:[%s1 + $0x2f8] sm:$0xff]
    %v158 = vld [vmem:[%s2] sm:$0x3]
    %v160 = vlaneseq
    %v161 = vshrl.u32 %v160, 7
    %v162 = vsub.s32 0, %v161
    %v163 = vrot.slane %v158, %v162
    %v164 = vlaneseq
    %v165 = vshrl.u32 %v164, 7
    %v166 = vsub.s32 1, %v165
    %v167 = vrot.slane %v158, %v166
    %v266 = vunpack.c.l.b16 %v62
    %v267 = vunpack.c.h.b16 %v62
    %v268 = vunpack.c.l.b16 %v63
    %v269 = vunpack.c.h.b16 %v63
    %v270 = vunpack.c.l.b16 %v64
    %v271 = vunpack.c.h.b16 %v64
    %v272 = vunpack.c.l.b16 %v65
    %v273 = vunpack.c.h.b16 %v65
    %v274 = vunpack.c.l.b16 %v66
    %v275 = vunpack.c.h.b16 %v66
    %v276 = vunpack.c.l.b16 %v67
    %v277 = vunpack.c.h.b16 %v67
    %v278 = vunpack.c.l.b16 %v68
    %v279 = vunpack.c.h.b16 %v68
    %v280 = vunpack.c.l.b16 %v69
    %v281 = vunpack.c.h.b16 %v69
    %v282 = vunpack.c.l.b16 %v70
    %v283 = vunpack.c.h.b16 %v70
    %v284 = vunpack.c.l.b16 %v71
    %v285 = vunpack.c.h.b16 %v71
    %v286 = vunpack.c.l.b16 %v72
    %v287 = vunpack.c.h.b16 %v72
    %v288 = vunpack.c.l.b16 %v73
    %v289 = vunpack.c.h.b16 %v73
    %v290 = vunpack.c.l.b16 %v74
    %v291 = vunpack.c.h.b16 %v74
    %v292 = vunpack.c.l.b16 %v75
    %v293 = vunpack.c.h.b16 %v75
    %v294 = vunpack.c.l.b16 %v76
    %v295 = vunpack.c.h.b16 %v76
    %v296 = vunpack.c.l.b16 %v77
    %v297 = vunpack.c.h.b16 %v77
    %v298 = vunpack.c.l.b16 %v78
    %v299 = vunpack.c.h.b16 %v78
    %v300 = vunpack.c.l.b16 %v79
    %v301 = vunpack.c.h.b16 %v79
    %v302 = vunpack.c.l.b16 %v80
    %v303 = vunpack.c.h.b16 %v80
    %v304 = vunpack.c.l.b16 %v81
    %v305 = vunpack.c.h.b16 %v81
    %v306 = vunpack.c.l.b16 %v82
    %v307 = vunpack.c.h.b16 %v82
    %v308 = vunpack.c.l.b16 %v83
    %v309 = vunpack.c.h.b16 %v83
    %v310 = vunpack.c.l.b16 %v84
    %v311 = vunpack.c.h.b16 %v84
    %v312 = vunpack.c.l.b16 %v85
    %v313 = vunpack.c.h.b16 %v85
    %v314 = vunpack.c.l.b16 %v86
    %v315 = vunpack.c.h.b16 %v86
    %v316 = vunpack.c.l.b16 %v87
    %v317 = vunpack.c.h.b16 %v87
    %v318 = vunpack.c.l.b16 %v88
    %v319 = vunpack.c.h.b16 %v88
    %v320 = vunpack.c.l.b16 %v89
    %v321 = vunpack.c.h.b16 %v89
    %v322 = vunpack.c.l.b16 %v90
    %v323 = vunpack.c.h.b16 %v90
    %v324 = vunpack.c.l.b16 %v91
    %v325 = vunpack.c.h.b16 %v91
    %v326 = vunpack.c.l.b16 %v92
    %v327 = vunpack.c.h.b16 %v92
    %v328 = vunpack.c.l.b16 %v93
    %v329 = vunpack.c.h.b16 %v93
    %v330 = vunpack.c.l.b16 %v94
    %v331 = vunpack.c.h.b16 %v94
    %v332 = vunpack.c.l.b16 %v95
    %v333 = vunpack.c.h.b16 %v95
    %v334 = vunpack.c.l.b16 %v96
    %v335 = vunpack.c.h.b16 %v96
    %v336 = vunpack.c.l.b16 %v97
    %v337 = vunpack.c.h.b16 %v97
    %v338 = vunpack.c.l.b16 %v98
    %v339 = vunpack.c.h.b16 %v98
    %v340 = vunpack.c.l.b16 %v99
    %v341 = vunpack.c.h.b16 %v99
    %v342 = vunpack.c.l.b16 %v100
    %v343 = vunpack.c.h.b16 %v100
    %v344 = vunpack.c.l.b16 %v101
    %v345 = vunpack.c.h.b16 %v101
    %v346 = vunpack.c.l.b16 %v102
    %v347 = vunpack.c.h.b16 %v102
    %v348 = vunpack.c.l.b16 %v103
    %v349 = vunpack.c.h.b16 %v103
    %v350 = vunpack.c.l.b16 %v104
    %v351 = vunpack.c.h.b16 %v104
    %v352 = vunpack.c.l.b16 %v105
    %v353 = vunpack.c.h.b16 %v105
    %v354 = vunpack.c.l.b16 %v106
    %v355 = vunpack.c.h.b16 %v106
    %v356 = vunpack.c.l.b16 %v107
    %v357 = vunpack.c.h.b16 %v107
    %v358 = vunpack.c.l.b16 %v108
    %v359 = vunpack.c.h.b16 %v108
    %v360 = vunpack.c.l.b16 %v109
    %v361 = vunpack.c.h.b16 %v109
    %v362 = vunpack.c.l.b16 %v110
    %v363 = vunpack.c.h.b16 %v110
    %v364 = vunpack.c.l.b16 %v111
    %v365 = vunpack.c.h.b16 %v111
    %v366 = vunpack.c.l.b16 %v112
    %v367 = vunpack.c.h.b16 %v112
    %v368 = vunpack.c.l.b16 %v113
    %v369 = vunpack.c.h.b16 %v113
    %v370 = vunpack.c.l.b16 %v114
    %v371 = vunpack.c.h.b16 %v114
    %v372 = vunpack.c.l.b16 %v115
    %v373 = vunpack.c.h.b16 %v115
    %v374 = vunpack.c.l.b16 %v116
    %v375 = vunpack.c.h.b16 %v116
    %v376 = vunpack.c.l.b16 %v117
    %v377 = vunpack.c.h.b16 %v117
    %v378 = vunpack.c.l.b16 %v118
    %v379 = vunpack.c.h.b16 %v118
    %v380 = vunpack.c.l.b16 %v119
    %v381 = vunpack.c.h.b16 %v119
    %v382 = vunpack.c.l.b16 %v120
    %v383 = vunpack.c.h.b16 %v120
    %v384 = vunpack.c.l.b16 %v121
    %v385 = vunpack.c.h.b16 %v121
    %v386 = vunpack.c.l.b16 %v122
    %v387 = vunpack.c.h.b16 %v122
    %v388 = vunpack.c.l.b16 %v123
    %v389 = vunpack.c.h.b16 %v123
    %v390 = vunpack.c.l.b16 %v124
    %v391 = vunpack.c.h.b16 %v124
    %v392 = vunpack.c.l.b16 %v125
    %v393 = vunpack.c.h.b16 %v125
    %v394 = vunpack.c.l.b16 %v126
    %v395 = vunpack.c.h.b16 %v126
    %v396 = vunpack.c.l.b16 %v127
    %v397 = vunpack.c.h.b16 %v127
    %v398 = vunpack.c.l.b16 %v128
    %v399 = vunpack.c.h.b16 %v128
    %v400 = vunpack.c.l.b16 %v129
    %v401 = vunpack.c.h.b16 %v129
    %v402 = vunpack.c.l.b16 %v130
    %v403 = vunpack.c.h.b16 %v130
    %v404 = vunpack.c.l.b16 %v131
    %v405 = vunpack.c.h.b16 %v131
    %v406 = vunpack.c.l.b16 %v132
    %v407 = vunpack.c.h.b16 %v132
    %v408 = vunpack.c.l.b16 %v133
    %v409 = vunpack.c.h.b16 %v133
    %v410 = vunpack.c.l.b16 %v134
    %v411 = vunpack.c.h.b16 %v134
    %v412 = vunpack.c.l.b16 %v135
    %v413 = vunpack.c.h.b16 %v135
    %v414 = vunpack.c.l.b16 %v136
    %v415 = vunpack.c.h.b16 %v136
    %v416 = vunpack.c.l.b16 %v137
    %v417 = vunpack.c.h.b16 %v137
    %v418 = vunpack.c.l.b16 %v138
    %v419 = vunpack.c.h.b16 %v138
    %v420 = vunpack.c.l.b16 %v139
    %v421 = vunpack.c.h.b16 %v139
    %v422 = vunpack.c.l.b16 %v140
    %v423 = vunpack.c.h.b16 %v140
    %v424 = vunpack.c.l.b16 %v141
    %v425 = vunpack.c.h.b16 %v141
    %v426 = vunpack.c.l.b16 %v142
    %v427 = vunpack.c.h.b16 %v142
    %v428 = vunpack.c.l.b16 %v143
    %v429 = vunpack.c.h.b16 %v143
    %v430 = vunpack.c.l.b16 %v144
    %v431 = vunpack.c.h.b16 %v144
    %v432 = vunpack.c.l.b16 %v145
    %v433 = vunpack.c.h.b16 %v145
    %v434 = vunpack.c.l.b16 %v146
    %v435 = vunpack.c.h.b16 %v146
    %v436 = vunpack.c.l.b16 %v147
    %v437 = vunpack.c.h.b16 %v147
    %v438 = vunpack.c.l.b16 %v148
    %v439 = vunpack.c.h.b16 %v148
    %v440 = vunpack.c.l.b16 %v149
    %v441 = vunpack.c.h.b16 %v149
    %v442 = vunpack.c.l.b16 %v150
    %v443 = vunpack.c.h.b16 %v150
    %v444 = vunpack.c.l.b16 %v151
    %v445 = vunpack.c.h.b16 %v151
    %v446 = vunpack.c.l.b16 %v152
    %v447 = vunpack.c.h.b16 %v152
    %v448 = vunpack.c.l.b16 %v153
    %v449 = vunpack.c.h.b16 %v153
    %v450 = vunpack.c.l.b16 %v154
    %v451 = vunpack.c.h.b16 %v154
    %v452 = vunpack.c.l.b16 %v155
    %v453 = vunpack.c.h.b16 %v155
    %v454 = vunpack.c.l.b16 %v156
    %v455 = vunpack.c.h.b16 %v156
    %v456 = vunpack.c.l.b16 %v157
    %v457 = vunpack.c.h.b16 %v157
    %v458 = vpack.c.b16 %v268, %v266
    %v459 = vpack.c.b16 %v269, %v267
    %v460 = vpack.c.b16 %v272, %v270
    %v461 = vpack.c.b16 %v273, %v271
    %v462 = vpack.c.b16 %v276, %v274
    %v463 = vpack.c.b16 %v277, %v275
    %v464 = vpack.c.b16 %v280, %v278
    %v465 = vpack.c.b16 %v281, %v279
    %v466 = vpack.c.b16 %v284, %v282
    %v467 = vpack.c.b16 %v285, %v283
    %v468 = vpack.c.b16 %v288, %v286
    %v469 = vpack.c.b16 %v289, %v287
    %v470 = vpack.c.b16 %v292, %v290
    %v471 = vpack.c.b16 %v293, %v291
    %v472 = vpack.c.b16 %v296, %v294
    %v473 = vpack.c.b16 %v297, %v295
    %v474 = vpack.c.b16 %v300, %v298
    %v475 = vpack.c.b16 %v301, %v299
    %v476 = vpack.c.b16 %v304, %v302
    %v477 = vpack.c.b16 %v305, %v303
    %v478 = vpack.c.b16 %v308, %v306
    %v479 = vpack.c.b16 %v309, %v307
    %v480 = vpack.c.b16 %v312, %v310
    %v481 = vpack.c.b16 %v313, %v311
    %v482 = vpack.c.b16 %v316, %v314
    %v483 = vpack.c.b16 %v317, %v315
    %v484 = vpack.c.b16 %v320, %v318
    %v485 = vpack.c.b16 %v321, %v319
    %v486 = vpack.c.b16 %v324, %v322
    %v487 = vpack.c.b16 %v325, %v323
    %v488 = vpack.c.b16 %v328, %v326
    %v489 = vpack.c.b16 %v329, %v327
    %v490 = vpack.c.b16 %v332, %v330
    %v491 = vpack.c.b16 %v333, %v331
    %v492 = vpack.c.b16 %v336, %v334
    %v493 = vpack.c.b16 %v337, %v335
    %v494 = vpack.c.b16 %v340, %v338
    %v495 = vpack.c.b16 %v341, %v339
    %v496 = vpack.c.b16 %v344, %v342
    %v497 = vpack.c.b16 %v345, %v343
    %v498 = vpack.c.b16 %v348, %v346
    %v499 = vpack.c.b16 %v349, %v347
    %v500 = vpack.c.b16 %v352, %v350
    %v501 = vpack.c.b16 %v353, %v351
    %v502 = vpack.c.b16 %v356, %v354
    %v503 = vpack.c.b16 %v357, %v355
    %v504 = vpack.c.b16 %v360, %v358
    %v505 = vpack.c.b16 %v361, %v359
    %v506 = vpack.c.b16 %v364, %v362
    %v507 = vpack.c.b16 %v365, %v363
    %v508 = vpack.c.b16 %v368, %v366
    %v509 = vpack.c.b16 %v369, %v367
    %v510 = vpack.c.b16 %v372, %v370
    %v511 = vpack.c.b16 %v373, %v371
    %v512 = vpack.c.b16 %v376, %v374
    %v513 = vpack.c.b16 %v377, %v375
    %v514 = vpack.c.b16 %v380, %v378
    %v515 = vpack.c.b16 %v381, %v379
    %v516 = vpack.c.b16 %v384, %v382
    %v517 = vpack.c.b16 %v385, %v383
    %v518 = vpack.c.b16 %v388, %v386
    %v519 = vpack.c.b16 %v389, %v387
    %v520 = vpack.c.b16 %v392, %v390
    %v521 = vpack.c.b16 %v393, %v391
    %v522 = vpack.c.b16 %v396, %v394
    %v523 = vpack.c.b16 %v397, %v395
    %v524 = vpack.c.b16 %v400, %v398
    %v525 = vpack.c.b16 %v401, %v399
    %v526 = vpack.c.b16 %v404, %v402
    %v527 = vpack.c.b16 %v405, %v403
    %v528 = vpack.c.b16 %v408, %v406
    %v529 = vpack.c.b16 %v409, %v407
    %v530 = vpack.c.b16 %v412, %v410
    %v531 = vpack.c.b16 %v413, %v411
    %v532 = vpack.c.b16 %v416, %v414
    %v533 = vpack.c.b16 %v417, %v415
    %v534 = vpack.c.b16 %v420, %v418
    %v535 = vpack.c.b16 %v421, %v419
    %v536 = vpack.c.b16 %v424, %v422
    %v537 = vpack.c.b16 %v425, %v423
    %v538 = vpack.c.b16 %v428, %v426
    %v539 = vpack.c.b16 %v429, %v427
    %v540 = vpack.c.b16 %v432, %v430
    %v541 = vpack.c.b16 %v433, %v431
    %v542 = vpack.c.b16 %v436, %v434
    %v543 = vpack.c.b16 %v437, %v435
    %v544 = vpack.c.b16 %v440, %v438
    %v545 = vpack.c.b16 %v441, %v439
    %v546 = vpack.c.b16 %v444, %v442
    %v547 = vpack.c.b16 %v445, %v443
    %v548 = vpack.c.b16 %v448, %v446
    %v549 = vpack.c.b16 %v449, %v447
    %v550 = vpack.c.b16 %v452, %v450
    %v551 = vpack.c.b16 %v453, %v451
    %v552 = vpack.c.b16 %v456, %v454
    %v553 = vpack.c.b16 %v457, %v455
    %650 = vmatprep.subr.bf16.mxu0 %v473
    %651 = vmatpush1.bf16.msra.mxu0 %v472
    %652 = vmatprep.subr.bf16.mxu0 %v471
    %653 = vmatpush1.bf16.msra.mxu0 %v470
    %654 = vmatprep.subr.bf16.mxu0 %v469
    %655 = vmatpush1.bf16.msra.mxu0 %v468
    %656 = vmatprep.subr.bf16.mxu0 %v467
    %657 = vmatpush1.bf16.msra.mxu0 %v466
    %658 = vmatprep.subr.bf16.mxu0 %v465
    %659 = vmatpush1.bf16.msra.mxu0 %v464
    %660 = vmatprep.subr.bf16.mxu0 %v463
    %661 = vmatpush1.bf16.msra.mxu0 %v462
    %662 = vmatprep.subr.bf16.mxu0 %v461
    %663 = vmatpush1.bf16.msra.mxu0 %v460
    %664 = vmatprep.subr.bf16.mxu0 %v459
    %665 = vmatpush1.bf16.msra.mxu0 %v458
    %666 = vmatprep.subr.bf16.mxu0 %v489
    %667 = vmatpush2.bf16.msra.mxu0 %v488
    %668 = vmatprep.subr.bf16.mxu0 %v487
    %669 = vmatpush2.bf16.msra.mxu0 %v486
    %670 = vmatprep.subr.bf16.mxu0 %v485
    %671 = vmatpush2.bf16.msra.mxu0 %v484
    %672 = vmatprep.subr.bf16.mxu0 %v483
    %673 = vmatpush2.bf16.msra.mxu0 %v482
    %674 = vmatprep.subr.bf16.mxu0 %v481
    %675 = vmatpush2.bf16.msra.mxu0 %v480
    %676 = vmatprep.subr.bf16.mxu0 %v479
    %677 = vmatpush2.bf16.msra.mxu0 %v478
    %678 = vmatprep.subr.bf16.mxu0 %v477
    %679 = vmatpush2.bf16.msra.mxu0 %v476
    %680 = vmatprep.subr.bf16.mxu0 %v475
    %681 = vmatpush2.bf16.msra.mxu0 %v474
    %682 = vmatprep.mubr.bf16.mxu0 %v57
    %683 = vmatmul.mubr.bf16.gmra.mxu0 %v56
    %v684 = vpop.f32.mrf.mxu0
    %v685 = vadd.f32 %v163, %v684
    %v686 = vpop.f32.mrf.mxu0
    %v687 = vadd.f32 %v167, %v686
    %v688 = vpop.f32.mrf.mxu0
    %v689 = vpop.f32.mrf.mxu0
    %690 = vdwg.mxu0
    %691 = vmatprep.subr.bf16.mxu0 %v505
    %692 = vmatpush1.bf16.msra.mxu0 %v504
    %693 = vmatprep.subr.bf16.mxu0 %v503
    %694 = vmatpush1.bf16.msra.mxu0 %v502
    %695 = vmatprep.subr.bf16.mxu0 %v501
    %696 = vmatpush1.bf16.msra.mxu0 %v500
    %697 = vmatprep.subr.bf16.mxu0 %v499
    %698 = vmatpush1.bf16.msra.mxu0 %v498
    %699 = vmatprep.subr.bf16.mxu0 %v497
    %700 = vmatpush1.bf16.msra.mxu0 %v496
    %701 = vmatprep.subr.bf16.mxu0 %v495
    %702 = vmatpush1.bf16.msra.mxu0 %v494
    %703 = vmatprep.subr.bf16.mxu0 %v493
    %704 = vmatpush1.bf16.msra.mxu0 %v492
    %705 = vmatprep.subr.bf16.mxu0 %v491
    %706 = vmatpush1.bf16.msra.mxu0 %v490
    %707 = vmatprep.subr.bf16.mxu0 %v521
    %708 = vmatpush2.bf16.msra.mxu0 %v520
    %709 = vmatprep.subr.bf16.mxu0 %v519
    %710 = vmatpush2.bf16.msra.mxu0 %v518
    %711 = vmatprep.subr.bf16.mxu0 %v517
    %712 = vmatpush2.bf16.msra.mxu0 %v516
    %713 = vmatprep.subr.bf16.mxu0 %v515
    %714 = vmatpush2.bf16.msra.mxu0 %v514
    %715 = vmatprep.subr.bf16.mxu0 %v513
    %716 = vmatpush2.bf16.msra.mxu0 %v512
    %717 = vmatprep.subr.bf16.mxu0 %v511
    %718 = vmatpush2.bf16.msra.mxu0 %v510
    %719 = vmatprep.subr.bf16.mxu0 %v509
    %720 = vmatpush2.bf16.msra.mxu0 %v508
    %721 = vmatprep.subr.bf16.mxu0 %v507
    %722 = vmatpush2.bf16.msra.mxu0 %v506
    %723 = vmatprep.mubr.bf16.mxu0 %v59
    %724 = vmatmul.mubr.bf16.gmra.mxu0 %v58
    %v725 = vpop.f32.mrf.mxu0
    %v726 = vadd.f32 %v685, %v725
    %v727 = vpop.f32.mrf.mxu0
    %v728 = vadd.f32 %v687, %v727
    %v729 = vpop.f32.mrf.mxu0
    %v730 = vpop.f32.mrf.mxu0
    %731 = vdwg.mxu0
    %732 = vmatprep.subr.bf16.mxu0 %v537
    %733 = vmatpush1.bf16.msra.mxu0 %v536
    %734 = vmatprep.subr.bf16.mxu0 %v535
    %735 = vmatpush1.bf16.msra.mxu0 %v534
    %736 = vmatprep.subr.bf16.mxu0 %v533
    %737 = vmatpush1.bf16.msra.mxu0 %v532
    %738 = vmatprep.subr.bf16.mxu0 %v531
    %739 = vmatpush1.bf16.msra.mxu0 %v530
    %740 = vmatprep.subr.bf16.mxu0 %v529
    %741 = vmatpush1.bf16.msra.mxu0 %v528
    %742 = vmatprep.subr.bf16.mxu0 %v527
    %743 = vmatpush1.bf16.msra.mxu0 %v526
    %744 = vmatprep.subr.bf16.mxu0 %v525
    %745 = vmatpush1.bf16.msra.mxu0 %v524
    %746 = vmatprep.subr.bf16.mxu0 %v523
    %747 = vmatpush1.bf16.msra.mxu0 %v522
    %748 = vmatprep.subr.bf16.mxu0 %v553
    %749 = vmatpush2.bf16.msra.mxu0 %v552
    %750 = vmatprep.subr.bf16.mxu0 %v551
    %751 = vmatpush2.bf16.msra.mxu0 %v550
    %752 = vmatprep.subr.bf16.mxu0 %v549
    %753 = vmatpush2.bf16.msra.mxu0 %v548
    %754 = vmatprep.subr.bf16.mxu0 %v547
    %755 = vmatpush2.bf16.msra.mxu0 %v546
    %756 = vmatprep.subr.bf16.mxu0 %v545
    %757 = vmatpush2.bf16.msra.mxu0 %v544
    %758 = vmatprep.subr.bf16.mxu0 %v543
    %759 = vmatpush2.bf16.msra.mxu0 %v542
    %760 = vmatprep.subr.bf16.mxu0 %v541
    %761 = vmatpush2.bf16.msra.mxu0 %v540
    %762 = vmatprep.subr.bf16.mxu0 %v539
    %763 = vmatpush2.bf16.msra.mxu0 %v538
    %764 = vmatprep.mubr.bf16.mxu0 %v61
    %765 = vmatmul.mubr.bf16.gmra.mxu0 %v60
    %v766 = vpop.f32.mrf.mxu0
    %v767 = vadd.f32 %v726, %v766
    %v768 = vpop.f32.mrf.mxu0
    %v769 = vadd.f32 %v728, %v768
    %v770 = vpop.f32.mrf.mxu0
    %v771 = vpop.f32.mrf.mxu0
    %772 = vdwg.mxu0
    %v773 = vpack.c.bf16 %v767, %v767
    %v774 = vpack.c.bf16 %v769, %v769
    %v775 = vld [vmem:[%s3] sm:$0xff]
    %v776 = vld [vmem:[%s3 + $0x8] sm:$0xff]
    %v777 = vld [vmem:[%s3 + $0x10] sm:$0xff]
    %v778 = vld [vmem:[%s3 + $0x18] sm:$0xff]
    %v779 = vld [vmem:[%s3 + $0x20] sm:$0xff]
    %v780 = vld [vmem:[%s3 + $0x28] sm:$0xff]
    %v781 = vld [vmem:[%s3 + $0x30] sm:$0xff]
    %v782 = vld [vmem:[%s3 + $0x38] sm:$0xff]
    %v783 = vld [vmem:[%s3 + $0x40] sm:$0xff]
    %v784 = vld [vmem:[%s3 + $0x48] sm:$0xff]
    %v785 = vld [vmem:[%s3 + $0x50] sm:$0xff]
    %v786 = vld [vmem:[%s3 + $0x58] sm:$0xff]
    %v787 = vld [vmem:[%s3 + $0x60] sm:$0xff]
    %v788 = vld [vmem:[%s3 + $0x68] sm:$0xff]
    %v789 = vld [vmem:[%s3 + $0x70] sm:$0xff]
    %v790 = vld [vmem:[%s3 + $0x78] sm:$0xff]
    %v791 = vld [vmem:[%s3 + $0x80] sm:$0xff]
    %v792 = vld [vmem:[%s3 + $0x88] sm:$0xff]
    %v793 = vld [vmem:[%s3 + $0x90] sm:$0xff]
    %v794 = vld [vmem:[%s3 + $0x98] sm:$0xff]
    %v795 = vld [vmem:[%s3 + $0xa0] sm:$0xff]
    %v796 = vld [vmem:[%s3 + $0xa8] sm:$0xff]
    %v797 = vld [vmem:[%s3 + $0xb0] sm:$0xff]
    %v798 = vld [vmem:[%s3 + $0xb8] sm:$0xff]
    %v799 = vld [vmem:[%s3 + $0xc0] sm:$0xff]
    %v800 = vld [vmem:[%s3 + $0xc8] sm:$0xff]
    %v801 = vld [vmem:[%s3 + $0xd0] sm:$0xff]
    %v802 = vld [vmem:[%s3 + $0xd8] sm:$0xff]
    %v803 = vld [vmem:[%s3 + $0xe0] sm:$0xff]
    %v804 = vld [vmem:[%s3 + $0xe8] sm:$0xff]
    %v805 = vld [vmem:[%s3 + $0xf0] sm:$0xff]
    %v806 = vld [vmem:[%s3 + $0xf8] sm:$0xff]
    %v807 = vld [vmem:[%s3 + $0x100] sm:$0xff]
    %v808 = vld [vmem:[%s3 + $0x108] sm:$0xff]
    %v809 = vld [vmem:[%s3 + $0x110] sm:$0xff]
    %v810 = vld [vmem:[%s3 + $0x118] sm:$0xff]
    %v811 = vld [vmem:[%s3 + $0x120] sm:$0xff]
    %v812 = vld [vmem:[%s3 + $0x128] sm:$0xff]
    %v813 = vld [vmem:[%s3 + $0x130] sm:$0xff]
    %v814 = vld [vmem:[%s3 + $0x138] sm:$0xff]
    %v815 = vld [vmem:[%s3 + $0x140] sm:$0xff]
    %v816 = vld [vmem:[%s3 + $0x148] sm:$0xff]
    %v817 = vld [vmem:[%s3 + $0x150] sm:$0xff]
    %v818 = vld [vmem:[%s3 + $0x158] sm:$0xff]
    %v819 = vld [vmem:[%s3 + $0x160] sm:$0xff]
    %v820 = vld [vmem:[%s3 + $0x168] sm:$0xff]
    %v821 = vld [vmem:[%s3 + $0x170] sm:$0xff]
    %v822 = vld [vmem:[%s3 + $0x178] sm:$0xff]
    %v823 = vld [vmem:[%s3 + $0x180] sm:$0xff]
    %v824 = vld [vmem:[%s3 + $0x188] sm:$0xff]
    %v825 = vld [vmem:[%s3 + $0x190] sm:$0xff]
    %v826 = vld [vmem:[%s3 + $0x198] sm:$0xff]
    %v827 = vld [vmem:[%s3 + $0x1a0] sm:$0xff]
    %v828 = vld [vmem:[%s3 + $0x1a8] sm:$0xff]
    %v829 = vld [vmem:[%s3 + $0x1b0] sm:$0xff]
    %v830 = vld [vmem:[%s3 + $0x1b8] sm:$0xff]
    %v831 = vld [vmem:[%s3 + $0x1c0] sm:$0xff]
    %v832 = vld [vmem:[%s3 + $0x1c8] sm:$0xff]
    %v833 = vld [vmem:[%s3 + $0x1d0] sm:$0xff]
    %v834 = vld [vmem:[%s3 + $0x1d8] sm:$0xff]
    %v835 = vld [vmem:[%s3 + $0x1e0] sm:$0xff]
    %v836 = vld [vmem:[%s3 + $0x1e8] sm:$0xff]
    %v837 = vld [vmem:[%s3 + $0x1f0] sm:$0xff]
    %v838 = vld [vmem:[%s3 + $0x1f8] sm:$0xff]
    %v839 = vld [vmem:[%s3 + $0x200] sm:$0xff]
    %v840 = vld [vmem:[%s3 + $0x208] sm:$0xff]
    %v841 = vld [vmem:[%s3 + $0x210] sm:$0xff]
    %v842 = vld [vmem:[%s3 + $0x218] sm:$0xff]
    %v843 = vld [vmem:[%s3 + $0x220] sm:$0xff]
    %v844 = vld [vmem:[%s3 + $0x228] sm:$0xff]
    %v845 = vld [vmem:[%s3 + $0x230] sm:$0xff]
    %v846 = vld [vmem:[%s3 + $0x238] sm:$0xff]
    %v847 = vld [vmem:[%s3 + $0x240] sm:$0xff]
    %v848 = vld [vmem:[%s3 + $0x248] sm:$0xff]
    %v849 = vld [vmem:[%s3 + $0x250] sm:$0xff]
    %v850 = vld [vmem:[%s3 + $0x258] sm:$0xff]
    %v851 = vld [vmem:[%s3 + $0x260] sm:$0xff]
    %v852 = vld [vmem:[%s3 + $0x268] sm:$0xff]
    %v853 = vld [vmem:[%s3 + $0x270] sm:$0xff]
    %v854 = vld [vmem:[%s3 + $0x278] sm:$0xff]
    %v855 = vld [vmem:[%s3 + $0x280] sm:$0xff]
    %v856 = vld [vmem:[%s3 + $0x288] sm:$0xff]
    %v857 = vld [vmem:[%s3 + $0x290] sm:$0xff]
    %v858 = vld [vmem:[%s3 + $0x298] sm:$0xff]
    %v859 = vld [vmem:[%s3 + $0x2a0] sm:$0xff]
    %v860 = vld [vmem:[%s3 + $0x2a8] sm:$0xff]
    %v861 = vld [vmem:[%s3 + $0x2b0] sm:$0xff]
    %v862 = vld [vmem:[%s3 + $0x2b8] sm:$0xff]
    %v863 = vld [vmem:[%s3 + $0x2c0] sm:$0xff]
    %v864 = vld [vmem:[%s3 + $0x2c8] sm:$0xff]
    %v865 = vld [vmem:[%s3 + $0x2d0] sm:$0xff]
    %v866 = vld [vmem:[%s3 + $0x2d8] sm:$0xff]
    %v867 = vld [vmem:[%s3 + $0x2e0] sm:$0xff]
    %v868 = vld [vmem:[%s3 + $0x2e8] sm:$0xff]
    %v869 = vld [vmem:[%s3 + $0x2f0] sm:$0xff]
    %v870 = vld [vmem:[%s3 + $0x2f8] sm:$0xff]
    %v871 = vld [vmem:[%s3 + $0x300] sm:$0xff]
    %v872 = vld [vmem:[%s3 + $0x308] sm:$0xff]
    %v873 = vld [vmem:[%s3 + $0x310] sm:$0xff]
    %v874 = vld [vmem:[%s3 + $0x318] sm:$0xff]
    %v875 = vld [vmem:[%s3 + $0x320] sm:$0xff]
    %v876 = vld [vmem:[%s3 + $0x328] sm:$0xff]
    %v877 = vld [vmem:[%s3 + $0x330] sm:$0xff]
    %v878 = vld [vmem:[%s3 + $0x338] sm:$0xff]
    %v879 = vld [vmem:[%s3 + $0x340] sm:$0xff]
    %v880 = vld [vmem:[%s3 + $0x348] sm:$0xff]
    %v881 = vld [vmem:[%s3 + $0x350] sm:$0xff]
    %v882 = vld [vmem:[%s3 + $0x358] sm:$0xff]
    %v883 = vld [vmem:[%s3 + $0x360] sm:$0xff]
    %v884 = vld [vmem:[%s3 + $0x368] sm:$0xff]
    %v885 = vld [vmem:[%s3 + $0x370] sm:$0xff]
    %v886 = vld [vmem:[%s3 + $0x378] sm:$0xff]
    %v887 = vld [vmem:[%s3 + $0x380] sm:$0xff]
    %v888 = vld [vmem:[%s3 + $0x388] sm:$0xff]
    %v889 = vld [vmem:[%s3 + $0x390] sm:$0xff]
    %v890 = vld [vmem:[%s3 + $0x398] sm:$0xff]
    %v891 = vld [vmem:[%s3 + $0x3a0] sm:$0xff]
    %v892 = vld [vmem:[%s3 + $0x3a8] sm:$0xff]
    %v893 = vld [vmem:[%s3 + $0x3b0] sm:$0xff]
    %v894 = vld [vmem:[%s3 + $0x3b8] sm:$0xff]
    %v895 = vld [vmem:[%s3 + $0x3c0] sm:$0xff]
    %v896 = vld [vmem:[%s3 + $0x3c8] sm:$0xff]
    %v897 = vld [vmem:[%s3 + $0x3d0] sm:$0xff]
    %v898 = vld [vmem:[%s3 + $0x3d8] sm:$0xff]
    %v899 = vld [vmem:[%s3 + $0x3e0] sm:$0xff]
    %v900 = vld [vmem:[%s3 + $0x3e8] sm:$0xff]
    %v901 = vld [vmem:[%s3 + $0x3f0] sm:$0xff]
    %v902 = vld [vmem:[%s3 + $0x3f8] sm:$0xff]
    %v903 = vld [vmem:[%s3 + $0x400] sm:$0xff]
    %v904 = vld [vmem:[%s3 + $0x408] sm:$0xff]
    %v905 = vld [vmem:[%s3 + $0x410] sm:$0xff]
    %v906 = vld [vmem:[%s3 + $0x418] sm:$0xff]
    %v907 = vld [vmem:[%s3 + $0x420] sm:$0xff]
    %v908 = vld [vmem:[%s3 + $0x428] sm:$0xff]
    %v909 = vld [vmem:[%s3 + $0x430] sm:$0xff]
    %v910 = vld [vmem:[%s3 + $0x438] sm:$0xff]
    %v911 = vld [vmem:[%s3 + $0x440] sm:$0xff]
    %v912 = vld [vmem:[%s3 + $0x448] sm:$0xff]
    %v913 = vld [vmem:[%s3 + $0x450] sm:$0xff]
    %v914 = vld [vmem:[%s3 + $0x458] sm:$0xff]
    %v915 = vld [vmem:[%s3 + $0x460] sm:$0xff]
    %v916 = vld [vmem:[%s3 + $0x468] sm:$0xff]
    %v917 = vld [vmem:[%s3 + $0x470] sm:$0xff]
    %v918 = vld [vmem:[%s3 + $0x478] sm:$0xff]
    %v919 = vld [vmem:[%s3 + $0x480] sm:$0xff]
    %v920 = vld [vmem:[%s3 + $0x488] sm:$0xff]
    %v921 = vld [vmem:[%s3 + $0x490] sm:$0xff]
    %v922 = vld [vmem:[%s3 + $0x498] sm:$0xff]
    %v923 = vld [vmem:[%s3 + $0x4a0] sm:$0xff]
    %v924 = vld [vmem:[%s3 + $0x4a8] sm:$0xff]
    %v925 = vld [vmem:[%s3 + $0x4b0] sm:$0xff]
    %v926 = vld [vmem:[%s3 + $0x4b8] sm:$0xff]
    %v927 = vld [vmem:[%s3 + $0x4c0] sm:$0xff]
    %v928 = vld [vmem:[%s3 + $0x4c8] sm:$0xff]
    %v929 = vld [vmem:[%s3 + $0x4d0] sm:$0xff]
    %v930 = vld [vmem:[%s3 + $0x4d8] sm:$0xff]
    %v931 = vld [vmem:[%s3 + $0x4e0] sm:$0xff]
    %v932 = vld [vmem:[%s3 + $0x4e8] sm:$0xff]
    %v933 = vld [vmem:[%s3 + $0x4f0] sm:$0xff]
    %v934 = vld [vmem:[%s3 + $0x4f8] sm:$0xff]
    %v935 = vld [vmem:[%s3 + $0x500] sm:$0xff]
    %v936 = vld [vmem:[%s3 + $0x508] sm:$0xff]
    %v937 = vld [vmem:[%s3 + $0x510] sm:$0xff]
    %v938 = vld [vmem:[%s3 + $0x518] sm:$0xff]
    %v939 = vld [vmem:[%s3 + $0x520] sm:$0xff]
    %v940 = vld [vmem:[%s3 + $0x528] sm:$0xff]
    %v941 = vld [vmem:[%s3 + $0x530] sm:$0xff]
    %v942 = vld [vmem:[%s3 + $0x538] sm:$0xff]
    %v943 = vld [vmem:[%s3 + $0x540] sm:$0xff]
    %v944 = vld [vmem:[%s3 + $0x548] sm:$0xff]
    %v945 = vld [vmem:[%s3 + $0x550] sm:$0xff]
    %v946 = vld [vmem:[%s3 + $0x558] sm:$0xff]
    %v947 = vld [vmem:[%s3 + $0x560] sm:$0xff]
    %v948 = vld [vmem:[%s3 + $0x568] sm:$0xff]
    %v949 = vld [vmem:[%s3 + $0x570] sm:$0xff]
    %v950 = vld [vmem:[%s3 + $0x578] sm:$0xff]
    %v951 = vld [vmem:[%s3 + $0x580] sm:$0xff]
    %v952 = vld [vmem:[%s3 + $0x588] sm:$0xff]
    %v953 = vld [vmem:[%s3 + $0x590] sm:$0xff]
    %v954 = vld [vmem:[%s3 + $0x598] sm:$0xff]
    %v955 = vld [vmem:[%s3 + $0x5a0] sm:$0xff]
    %v956 = vld [vmem:[%s3 + $0x5a8] sm:$0xff]
    %v957 = vld [vmem:[%s3 + $0x5b0] sm:$0xff]
    %v958 = vld [vmem:[%s3 + $0x5b8] sm:$0xff]
    %v959 = vld [vmem:[%s3 + $0x5c0] sm:$0xff]
    %v960 = vld [vmem:[%s3 + $0x5c8] sm:$0xff]
    %v961 = vld [vmem:[%s3 + $0x5d0] sm:$0xff]
    %v962 = vld [vmem:[%s3 + $0x5d8] sm:$0xff]
    %v963 = vld [vmem:[%s3 + $0x5e0] sm:$0xff]
    %v964 = vld [vmem:[%s3 + $0x5e8] sm:$0xff]
    %v965 = vld [vmem:[%s3 + $0x5f0] sm:$0xff]
    %v966 = vld [vmem:[%s3 + $0x5f8] sm:$0xff]
    %v967 = vld [vmem:[%s3 + $0x600] sm:$0xff]
    %v968 = vld [vmem:[%s3 + $0x608] sm:$0xff]
    %v969 = vld [vmem:[%s3 + $0x610] sm:$0xff]
    %v970 = vld [vmem:[%s3 + $0x618] sm:$0xff]
    %v971 = vld [vmem:[%s3 + $0x620] sm:$0xff]
    %v972 = vld [vmem:[%s3 + $0x628] sm:$0xff]
    %v973 = vld [vmem:[%s3 + $0x630] sm:$0xff]
    %v974 = vld [vmem:[%s3 + $0x638] sm:$0xff]
    %v975 = vld [vmem:[%s3 + $0x640] sm:$0xff]
    %v976 = vld [vmem:[%s3 + $0x648] sm:$0xff]
    %v977 = vld [vmem:[%s3 + $0x650] sm:$0xff]
    %v978 = vld [vmem:[%s3 + $0x658] sm:$0xff]
    %v979 = vld [vmem:[%s3 + $0x660] sm:$0xff]
    %v980 = vld [vmem:[%s3 + $0x668] sm:$0xff]
    %v981 = vld [vmem:[%s3 + $0x670] sm:$0xff]
    %v982 = vld [vmem:[%s3 + $0x678] sm:$0xff]
    %v983 = vld [vmem:[%s3 + $0x680] sm:$0xff]
    %v984 = vld [vmem:[%s3 + $0x688] sm:$0xff]
    %v985 = vld [vmem:[%s3 + $0x690] sm:$0xff]
    %v986 = vld [vmem:[%s3 + $0x698] sm:$0xff]
    %v987 = vld [vmem:[%s3 + $0x6a0] sm:$0xff]
    %v988 = vld [vmem:[%s3 + $0x6a8] sm:$0xff]
    %v989 = vld [vmem:[%s3 + $0x6b0] sm:$0xff]
    %v990 = vld [vmem:[%s3 + $0x6b8] sm:$0xff]
    %v991 = vld [vmem:[%s3 + $0x6c0] sm:$0xff]
    %v992 = vld [vmem:[%s3 + $0x6c8] sm:$0xff]
    %v993 = vld [vmem:[%s3 + $0x6d0] sm:$0xff]
    %v994 = vld [vmem:[%s3 + $0x6d8] sm:$0xff]
    %v995 = vld [vmem:[%s3 + $0x6e0] sm:$0xff]
    %v996 = vld [vmem:[%s3 + $0x6e8] sm:$0xff]
    %v997 = vld [vmem:[%s3 + $0x6f0] sm:$0xff]
    %v998 = vld [vmem:[%s3 + $0x6f8] sm:$0xff]
    %v999 = vld [vmem:[%s3 + $0x700] sm:$0xff]
    %v1000 = vld [vmem:[%s3 + $0x708] sm:$0xff]
    %v1001 = vld [vmem:[%s3 + $0x710] sm:$0xff]
    %v1002 = vld [vmem:[%s3 + $0x718] sm:$0xff]
    %v1003 = vld [vmem:[%s3 + $0x720] sm:$0xff]
    %v1004 = vld [vmem:[%s3 + $0x728] sm:$0xff]
    %v1005 = vld [vmem:[%s3 + $0x730] sm:$0xff]
    %v1006 = vld [vmem:[%s3 + $0x738] sm:$0xff]
    %v1007 = vld [vmem:[%s3 + $0x740] sm:$0xff]
    %v1008 = vld [vmem:[%s3 + $0x748] sm:$0xff]
    %v1009 = vld [vmem:[%s3 + $0x750] sm:$0xff]
    %v1010 = vld [vmem:[%s3 + $0x758] sm:$0xff]
    %v1011 = vld [vmem:[%s3 + $0x760] sm:$0xff]
    %v1012 = vld [vmem:[%s3 + $0x768] sm:$0xff]
    %v1013 = vld [vmem:[%s3 + $0x770] sm:$0xff]
    %v1014 = vld [vmem:[%s3 + $0x778] sm:$0xff]
    %v1015 = vld [vmem:[%s3 + $0x780] sm:$0xff]
    %v1016 = vld [vmem:[%s3 + $0x788] sm:$0xff]
    %v1017 = vld [vmem:[%s3 + $0x790] sm:$0xff]
    %v1018 = vld [vmem:[%s3 + $0x798] sm:$0xff]
    %v1019 = vld [vmem:[%s3 + $0x7a0] sm:$0xff]
    %v1020 = vld [vmem:[%s3 + $0x7a8] sm:$0xff]
    %v1021 = vld [vmem:[%s3 + $0x7b0] sm:$0xff]
    %v1022 = vld [vmem:[%s3 + $0x7b8] sm:$0xff]
    %v1023 = vld [vmem:[%s3 + $0x7c0] sm:$0xff]
    %v1024 = vld [vmem:[%s3 + $0x7c8] sm:$0xff]
    %v1025 = vld [vmem:[%s3 + $0x7d0] sm:$0xff]
    %v1026 = vld [vmem:[%s3 + $0x7d8] sm:$0xff]
    %v1027 = vld [vmem:[%s3 + $0x7e0] sm:$0xff]
    %v1028 = vld [vmem:[%s3 + $0x7e8] sm:$0xff]
    %v1029 = vld [vmem:[%s3 + $0x7f0] sm:$0xff]
    %v1030 = vld [vmem:[%s3 + $0x7f8] sm:$0xff]
    %v1031 = vld [vmem:[%s4] sm:$0xff]
    %v1032 = vld [vmem:[%s4 + $0x8] sm:$0xff]
    %v1035 = vlaneseq
    %v1036 = vshrl.u32 %v1035, 7
    %v1037 = vsub.s32 0, %v1036
    %v1038 = vrot.slane %v1031, %v1037
    %v1039 = vlaneseq
    %v1040 = vshrl.u32 %v1039, 7
    %v1041 = vsub.s32 1, %v1040
    %v1042 = vrot.slane %v1031, %v1041
    %v1043 = vlaneseq
    %v1044 = vshrl.u32 %v1043, 7
    %v1045 = vsub.s32 2, %v1044
    %v1046 = vrot.slane %v1031, %v1045
    %v1047 = vlaneseq
    %v1048 = vshrl.u32 %v1047, 7
    %v1049 = vsub.s32 3, %v1048
    %v1050 = vrot.slane %v1031, %v1049
    %v1051 = vlaneseq
    %v1052 = vshrl.u32 %v1051, 7
    %v1053 = vsub.s32 4, %v1052
    %v1054 = vrot.slane %v1031, %v1053
    %v1055 = vlaneseq
    %v1056 = vshrl.u32 %v1055, 7
    %v1057 = vsub.s32 5, %v1056
    %v1058 = vrot.slane %v1031, %v1057
    %v1059 = vlaneseq
    %v1060 = vshrl.u32 %v1059, 7
    %v1061 = vsub.s32 6, %v1060
    %v1062 = vrot.slane %v1031, %v1061
    %v1063 = vlaneseq
    %v1064 = vshrl.u32 %v1063, 7
    %v1065 = vsub.s32 7, %v1064
    %v1066 = vrot.slane %v1031, %v1065
    %v1067 = vlaneseq
    %v1068 = vshrl.u32 %v1067, 7
    %v1069 = vsub.s32 0, %v1068
    %v1070 = vrot.slane %v1032, %v1069
    %v1071 = vlaneseq
    %v1072 = vshrl.u32 %v1071, 7
    %v1073 = vsub.s32 1, %v1072
    %v1074 = vrot.slane %v1032, %v1073
    %v1075 = vlaneseq
    %v1076 = vshrl.u32 %v1075, 7
    %v1077 = vsub.s32 2, %v1076
    %v1078 = vrot.slane %v1032, %v1077
    %v1079 = vlaneseq
    %v1080 = vshrl.u32 %v1079, 7
    %v1081 = vsub.s32 3, %v1080
    %v1082 = vrot.slane %v1032, %v1081
    %v1083 = vlaneseq
    %v1084 = vshrl.u32 %v1083, 7
    %v1085 = vsub.s32 4, %v1084
    %v1086 = vrot.slane %v1032, %v1085
    %v1087 = vlaneseq
    %v1088 = vshrl.u32 %v1087, 7
    %v1089 = vsub.s32 5, %v1088
    %v1090 = vrot.slane %v1032, %v1089
    %v1091 = vlaneseq
    %v1092 = vshrl.u32 %v1091, 7
    %v1093 = vsub.s32 6, %v1092
    %v1094 = vrot.slane %v1032, %v1093
    %v1095 = vlaneseq
    %v1096 = vshrl.u32 %v1095, 7
    %v1097 = vsub.s32 7, %v1096
    %v1098 = vrot.slane %v1032, %v1097
    %v1371 = vunpack.c.l.b16 %v775
    %v1372 = vunpack.c.h.b16 %v775
    %v1373 = vunpack.c.l.b16 %v776
    %v1374 = vunpack.c.h.b16 %v776
    %v1375 = vunpack.c.l.b16 %v777
    %v1376 = vunpack.c.h.b16 %v777
    %v1377 = vunpack.c.l.b16 %v778
    %v1378 = vunpack.c.h.b16 %v778
    %v1379 = vunpack.c.l.b16 %v779
    %v1380 = vunpack.c.h.b16 %v779
    %v1381 = vunpack.c.l.b16 %v780
    %v1382 = vunpack.c.h.b16 %v780
    %v1383 = vunpack.c.l.b16 %v781
    %v1384 = vunpack.c.h.b16 %v781
    %v1385 = vunpack.c.l.b16 %v782
    %v1386 = vunpack.c.h.b16 %v782
    %v1387 = vunpack.c.l.b16 %v783
    %v1388 = vunpack.c.h.b16 %v783
    %v1389 = vunpack.c.l.b16 %v784
    %v1390 = vunpack.c.h.b16 %v784
    %v1391 = vunpack.c.l.b16 %v785
    %v1392 = vunpack.c.h.b16 %v785
    %v1393 = vunpack.c.l.b16 %v786
    %v1394 = vunpack.c.h.b16 %v786
    %v1395 = vunpack.c.l.b16 %v787
    %v1396 = vunpack.c.h.b16 %v787
    %v1397 = vunpack.c.l.b16 %v788
    %v1398 = vunpack.c.h.b16 %v788
    %v1399 = vunpack.c.l.b16 %v789
    %v1400 = vunpack.c.h.b16 %v789
    %v1401 = vunpack.c.l.b16 %v790
    %v1402 = vunpack.c.h.b16 %v790
    %v1403 = vunpack.c.l.b16 %v791
    %v1404 = vunpack.c.h.b16 %v791
    %v1405 = vunpack.c.l.b16 %v792
    %v1406 = vunpack.c.h.b16 %v792
    %v1407 = vunpack.c.l.b16 %v793
    %v1408 = vunpack.c.h.b16 %v793
    %v1409 = vunpack.c.l.b16 %v794
    %v1410 = vunpack.c.h.b16 %v794
    %v1411 = vunpack.c.l.b16 %v795
    %v1412 = vunpack.c.h.b16 %v795
    %v1413 = vunpack.c.l.b16 %v796
    %v1414 = vunpack.c.h.b16 %v796
    %v1415 = vunpack.c.l.b16 %v797
    %v1416 = vunpack.c.h.b16 %v797
    %v1417 = vunpack.c.l.b16 %v798
    %v1418 = vunpack.c.h.b16 %v798
    %v1419 = vunpack.c.l.b16 %v799
    %v1420 = vunpack.c.h.b16 %v799
    %v1421 = vunpack.c.l.b16 %v800
    %v1422 = vunpack.c.h.b16 %v800
    %v1423 = vunpack.c.l.b16 %v801
    %v1424 = vunpack.c.h.b16 %v801
    %v1425 = vunpack.c.l.b16 %v802
    %v1426 = vunpack.c.h.b16 %v802
    %v1427 = vunpack.c.l.b16 %v803
    %v1428 = vunpack.c.h.b16 %v803
    %v1429 = vunpack.c.l.b16 %v804
    %v1430 = vunpack.c.h.b16 %v804
    %v1431 = vunpack.c.l.b16 %v805
    %v1432 = vunpack.c.h.b16 %v805
    %v1433 = vunpack.c.l.b16 %v806
    %v1434 = vunpack.c.h.b16 %v806
    %v1435 = vunpack.c.l.b16 %v807
    %v1436 = vunpack.c.h.b16 %v807
    %v1437 = vunpack.c.l.b16 %v808
    %v1438 = vunpack.c.h.b16 %v808
    %v1439 = vunpack.c.l.b16 %v809
    %v1440 = vunpack.c.h.b16 %v809
    %v1441 = vunpack.c.l.b16 %v810
    %v1442 = vunpack.c.h.b16 %v810
    %v1443 = vunpack.c.l.b16 %v811
    %v1444 = vunpack.c.h.b16 %v811
    %v1445 = vunpack.c.l.b16 %v812
    %v1446 = vunpack.c.h.b16 %v812
    %v1447 = vunpack.c.l.b16 %v813
    %v1448 = vunpack.c.h.b16 %v813
    %v1449 = vunpack.c.l.b16 %v814
    %v1450 = vunpack.c.h.b16 %v814
    %v1451 = vunpack.c.l.b16 %v815
    %v1452 = vunpack.c.h.b16 %v815
    %v1453 = vunpack.c.l.b16 %v816
    %v1454 = vunpack.c.h.b16 %v816
    %v1455 = vunpack.c.l.b16 %v817
    %v1456 = vunpack.c.h.b16 %v817
    %v1457 = vunpack.c.l.b16 %v818
    %v1458 = vunpack.c.h.b16 %v818
    %v1459 = vunpack.c.l.b16 %v819
    %v1460 = vunpack.c.h.b16 %v819
    %v1461 = vunpack.c.l.b16 %v820
    %v1462 = vunpack.c.h.b16 %v820
    %v1463 = vunpack.c.l.b16 %v821
    %v1464 = vunpack.c.h.b16 %v821
    %v1465 = vunpack.c.l.b16 %v822
    %v1466 = vunpack.c.h.b16 %v822
    %v1467 = vunpack.c.l.b16 %v823
    %v1468 = vunpack.c.h.b16 %v823
    %v1469 = vunpack.c.l.b16 %v824
    %v1470 = vunpack.c.h.b16 %v824
    %v1471 = vunpack.c.l.b16 %v825
    %v1472 = vunpack.c.h.b16 %v825
    %v1473 = vunpack.c.l.b16 %v826
    %v1474 = vunpack.c.h.b16 %v826
    %v1475 = vunpack.c.l.b16 %v827
    %v1476 = vunpack.c.h.b16 %v827
    %v1477 = vunpack.c.l.b16 %v828
    %v1478 = vunpack.c.h.b16 %v828
    %v1479 = vunpack.c.l.b16 %v829
    %v1480 = vunpack.c.h.b16 %v829
    %v1481 = vunpack.c.l.b16 %v830
    %v1482 = vunpack.c.h.b16 %v830
    %v1483 = vunpack.c.l.b16 %v831
    %v1484 = vunpack.c.h.b16 %v831
    %v1485 = vunpack.c.l.b16 %v832
    %v1486 = vunpack.c.h.b16 %v832
    %v1487 = vunpack.c.l.b16 %v833
    %v1488 = vunpack.c.h.b16 %v833
    %v1489 = vunpack.c.l.b16 %v834
    %v1490 = vunpack.c.h.b16 %v834
    %v1491 = vunpack.c.l.b16 %v835
    %v1492 = vunpack.c.h.b16 %v835
    %v1493 = vunpack.c.l.b16 %v836
    %v1494 = vunpack.c.h.b16 %v836
    %v1495 = vunpack.c.l.b16 %v837
    %v1496 = vunpack.c.h.b16 %v837
    %v1497 = vunpack.c.l.b16 %v838
    %v1498 = vunpack.c.h.b16 %v838
    %v1499 = vunpack.c.l.b16 %v839
    %v1500 = vunpack.c.h.b16 %v839
    %v1501 = vunpack.c.l.b16 %v840
    %v1502 = vunpack.c.h.b16 %v840
    %v1503 = vunpack.c.l.b16 %v841
    %v1504 = vunpack.c.h.b16 %v841
    %v1505 = vunpack.c.l.b16 %v842
    %v1506 = vunpack.c.h.b16 %v842
    %v1507 = vunpack.c.l.b16 %v843
    %v1508 = vunpack.c.h.b16 %v843
    %v1509 = vunpack.c.l.b16 %v844
    %v1510 = vunpack.c.h.b16 %v844
    %v1511 = vunpack.c.l.b16 %v845
    %v1512 = vunpack.c.h.b16 %v845
    %v1513 = vunpack.c.l.b16 %v846
    %v1514 = vunpack.c.h.b16 %v846
    %v1515 = vunpack.c.l.b16 %v847
    %v1516 = vunpack.c.h.b16 %v847
    %v1517 = vunpack.c.l.b16 %v848
    %v1518 = vunpack.c.h.b16 %v848
    %v1519 = vunpack.c.l.b16 %v849
    %v1520 = vunpack.c.h.b16 %v849
    %v1521 = vunpack.c.l.b16 %v850
    %v1522 = vunpack.c.h.b16 %v850
    %v1523 = vunpack.c.l.b16 %v851
    %v1524 = vunpack.c.h.b16 %v851
    %v1525 = vunpack.c.l.b16 %v852
    %v1526 = vunpack.c.h.b16 %v852
    %v1527 = vunpack.c.l.b16 %v853
    %v1528 = vunpack.c.h.b16 %v853
    %v1529 = vunpack.c.l.b16 %v854
    %v1530 = vunpack.c.h.b16 %v854
    %v1531 = vunpack.c.l.b16 %v855
    %v1532 = vunpack.c.h.b16 %v855
    %v1533 = vunpack.c.l.b16 %v856
    %v1534 = vunpack.c.h.b16 %v856
    %v1535 = vunpack.c.l.b16 %v857
    %v1536 = vunpack.c.h.b16 %v857
    %v1537 = vunpack.c.l.b16 %v858
    %v1538 = vunpack.c.h.b16 %v858
    %v1539 = vunpack.c.l.b16 %v859
    %v1540 = vunpack.c.h.b16 %v859
    %v1541 = vunpack.c.l.b16 %v860
    %v1542 = vunpack.c.h.b16 %v860
    %v1543 = vunpack.c.l.b16 %v861
    %v1544 = vunpack.c.h.b16 %v861
    %v1545 = vunpack.c.l.b16 %v862
    %v1546 = vunpack.c.h.b16 %v862
    %v1547 = vunpack.c.l.b16 %v863
    %v1548 = vunpack.c.h.b16 %v863
    %v1549 = vunpack.c.l.b16 %v864
    %v1550 = vunpack.c.h.b16 %v864
    %v1551 = vunpack.c.l.b16 %v865
    %v1552 = vunpack.c.h.b16 %v865
    %v1553 = vunpack.c.l.b16 %v866
    %v1554 = vunpack.c.h.b16 %v866
    %v1555 = vunpack.c.l.b16 %v867
    %v1556 = vunpack.c.h.b16 %v867
    %v1557 = vunpack.c.l.b16 %v868
    %v1558 = vunpack.c.h.b16 %v868
    %v1559 = vunpack.c.l.b16 %v869
    %v1560 = vunpack.c.h.b16 %v869
    %v1561 = vunpack.c.l.b16 %v870
    %v1562 = vunpack.c.h.b16 %v870
    %v1563 = vunpack.c.l.b16 %v871
    %v1564 = vunpack.c.h.b16 %v871
    %v1565 = vunpack.c.l.b16 %v872
    %v1566 = vunpack.c.h.b16 %v872
    %v1567 = vunpack.c.l.b16 %v873
    %v1568 = vunpack.c.h.b16 %v873
    %v1569 = vunpack.c.l.b16 %v874
    %v1570 = vunpack.c.h.b16 %v874
    %v1571 = vunpack.c.l.b16 %v875
    %v1572 = vunpack.c.h.b16 %v875
    %v1573 = vunpack.c.l.b16 %v876
    %v1574 = vunpack.c.h.b16 %v876
    %v1575 = vunpack.c.l.b16 %v877
    %v1576 = vunpack.c.h.b16 %v877
    %v1577 = vunpack.c.l.b16 %v878
    %v1578 = vunpack.c.h.b16 %v878
    %v1579 = vunpack.c.l.b16 %v879
    %v1580 = vunpack.c.h.b16 %v879
    %v1581 = vunpack.c.l.b16 %v880
    %v1582 = vunpack.c.h.b16 %v880
    %v1583 = vunpack.c.l.b16 %v881
    %v1584 = vunpack.c.h.b16 %v881
    %v1585 = vunpack.c.l.b16 %v882
    %v1586 = vunpack.c.h.b16 %v882
    %v1587 = vunpack.c.l.b16 %v883
    %v1588 = vunpack.c.h.b16 %v883
    %v1589 = vunpack.c.l.b16 %v884
    %v1590 = vunpack.c.h.b16 %v884
    %v1591 = vunpack.c.l.b16 %v885
    %v1592 = vunpack.c.h.b16 %v885
    %v1593 = vunpack.c.l.b16 %v886
    %v1594 = vunpack.c.h.b16 %v886
    %v1595 = vunpack.c.l.b16 %v887
    %v1596 = vunpack.c.h.b16 %v887
    %v1597 = vunpack.c.l.b16 %v888
    %v1598 = vunpack.c.h.b16 %v888
    %v1599 = vunpack.c.l.b16 %v889
    %v1600 = vunpack.c.h.b16 %v889
    %v1601 = vunpack.c.l.b16 %v890
    %v1602 = vunpack.c.h.b16 %v890
    %v1603 = vunpack.c.l.b16 %v891
    %v1604 = vunpack.c.h.b16 %v891
    %v1605 = vunpack.c.l.b16 %v892
    %v1606 = vunpack.c.h.b16 %v892
    %v1607 = vunpack.c.l.b16 %v893
    %v1608 = vunpack.c.h.b16 %v893
    %v1609 = vunpack.c.l.b16 %v894
    %v1610 = vunpack.c.h.b16 %v894
    %v1611 = vunpack.c.l.b16 %v895
    %v1612 = vunpack.c.h.b16 %v895
    %v1613 = vunpack.c.l.b16 %v896
    %v1614 = vunpack.c.h.b16 %v896
    %v1615 = vunpack.c.l.b16 %v897
    %v1616 = vunpack.c.h.b16 %v897
    %v1617 = vunpack.c.l.b16 %v898
    %v1618 = vunpack.c.h.b16 %v898
    %v1619 = vunpack.c.l.b16 %v899
    %v1620 = vunpack.c.h.b16 %v899
    %v1621 = vunpack.c.l.b16 %v900
    %v1622 = vunpack.c.h.b16 %v900
    %v1623 = vunpack.c.l.b16 %v901
    %v1624 = vunpack.c.h.b16 %v901
    %v1625 = vunpack.c.l.b16 %v902
    %v1626 = vunpack.c.h.b16 %v902
    %v1627 = vunpack.c.l.b16 %v903
    %v1628 = vunpack.c.h.b16 %v903
    %v1629 = vunpack.c.l.b16 %v904
    %v1630 = vunpack.c.h.b16 %v904
    %v1631 = vunpack.c.l.b16 %v905
    %v1632 = vunpack.c.h.b16 %v905
    %v1633 = vunpack.c.l.b16 %v906
    %v1634 = vunpack.c.h.b16 %v906
    %v1635 = vunpack.c.l.b16 %v907
    %v1636 = vunpack.c.h.b16 %v907
    %v1637 = vunpack.c.l.b16 %v908
    %v1638 = vunpack.c.h.b16 %v908
    %v1639 = vunpack.c.l.b16 %v909
    %v1640 = vunpack.c.h.b16 %v909
    %v1641 = vunpack.c.l.b16 %v910
    %v1642 = vunpack.c.h.b16 %v910
    %v1643 = vunpack.c.l.b16 %v911
    %v1644 = vunpack.c.h.b16 %v911
    %v1645 = vunpack.c.l.b16 %v912
    %v1646 = vunpack.c.h.b16 %v912
    %v1647 = vunpack.c.l.b16 %v913
    %v1648 = vunpack.c.h.b16 %v913
    %v1649 = vunpack.c.l.b16 %v914
    %v1650 = vunpack.c.h.b16 %v914
    %v1651 = vunpack.c.l.b16 %v915
    %v1652 = vunpack.c.h.b16 %v915
    %v1653 = vunpack.c.l.b16 %v916
    %v1654 = vunpack.c.h.b16 %v916
    %v1655 = vunpack.c.l.b16 %v917
    %v1656 = vunpack.c.h.b16 %v917
    %v1657 = vunpack.c.l.b16 %v918
    %v1658 = vunpack.c.h.b16 %v918
    %v1659 = vunpack.c.l.b16 %v919
    %v1660 = vunpack.c.h.b16 %v919
    %v1661 = vunpack.c.l.b16 %v920
    %v1662 = vunpack.c.h.b16 %v920
    %v1663 = vunpack.c.l.b16 %v921
    %v1664 = vunpack.c.h.b16 %v921
    %v1665 = vunpack.c.l.b16 %v922
    %v1666 = vunpack.c.h.b16 %v922
    %v1667 = vunpack.c.l.b16 %v923
    %v1668 = vunpack.c.h.b16 %v923
    %v1669 = vunpack.c.l.b16 %v924
    %v1670 = vunpack.c.h.b16 %v924
    %v1671 = vunpack.c.l.b16 %v925
    %v1672 = vunpack.c.h.b16 %v925
    %v1673 = vunpack.c.l.b16 %v926
    %v1674 = vunpack.c.h.b16 %v926
    %v1675 = vunpack.c.l.b16 %v927
    %v1676 = vunpack.c.h.b16 %v927
    %v1677 = vunpack.c.l.b16 %v928
    %v1678 = vunpack.c.h.b16 %v928
    %v1679 = vunpack.c.l.b16 %v929
    %v1680 = vunpack.c.h.b16 %v929
    %v1681 = vunpack.c.l.b16 %v930
    %v1682 = vunpack.c.h.b16 %v930
    %v1683 = vunpack.c.l.b16 %v931
    %v1684 = vunpack.c.h.b16 %v931
    %v1685 = vunpack.c.l.b16 %v932
    %v1686 = vunpack.c.h.b16 %v932
    %v1687 = vunpack.c.l.b16 %v933
    %v1688 = vunpack.c.h.b16 %v933
    %v1689 = vunpack.c.l.b16 %v934
    %v1690 = vunpack.c.h.b16 %v934
    %v1691 = vunpack.c.l.b16 %v935
    %v1692 = vunpack.c.h.b16 %v935
    %v1693 = vunpack.c.l.b16 %v936
    %v1694 = vunpack.c.h.b16 %v936
    %v1695 = vunpack.c.l.b16 %v937
    %v1696 = vunpack.c.h.b16 %v937
    %v1697 = vunpack.c.l.b16 %v938
    %v1698 = vunpack.c.h.b16 %v938
    %v1699 = vunpack.c.l.b16 %v939
    %v1700 = vunpack.c.h.b16 %v939
    %v1701 = vunpack.c.l.b16 %v940
    %v1702 = vunpack.c.h.b16 %v940
    %v1703 = vunpack.c.l.b16 %v941
    %v1704 = vunpack.c.h.b16 %v941
    %v1705 = vunpack.c.l.b16 %v942
    %v1706 = vunpack.c.h.b16 %v942
    %v1707 = vunpack.c.l.b16 %v943
    %v1708 = vunpack.c.h.b16 %v943
    %v1709 = vunpack.c.l.b16 %v944
    %v1710 = vunpack.c.h.b16 %v944
    %v1711 = vunpack.c.l.b16 %v945
    %v1712 = vunpack.c.h.b16 %v945
    %v1713 = vunpack.c.l.b16 %v946
    %v1714 = vunpack.c.h.b16 %v946
    %v1715 = vunpack.c.l.b16 %v947
    %v1716 = vunpack.c.h.b16 %v947
    %v1717 = vunpack.c.l.b16 %v948
    %v1718 = vunpack.c.h.b16 %v948
    %v1719 = vunpack.c.l.b16 %v949
    %v1720 = vunpack.c.h.b16 %v949
    %v1721 = vunpack.c.l.b16 %v950
    %v1722 = vunpack.c.h.b16 %v950
    %v1723 = vunpack.c.l.b16 %v951
    %v1724 = vunpack.c.h.b16 %v951
    %v1725 = vunpack.c.l.b16 %v952
    %v1726 = vunpack.c.h.b16 %v952
    %v1727 = vunpack.c.l.b16 %v953
    %v1728 = vunpack.c.h.b16 %v953
    %v1729 = vunpack.c.l.b16 %v954
    %v1730 = vunpack.c.h.b16 %v954
    %v1731 = vunpack.c.l.b16 %v955
    %v1732 = vunpack.c.h.b16 %v955
    %v1733 = vunpack.c.l.b16 %v956
    %v1734 = vunpack.c.h.b16 %v956
    %v1735 = vunpack.c.l.b16 %v957
    %v1736 = vunpack.c.h.b16 %v957
    %v1737 = vunpack.c.l.b16 %v958
    %v1738 = vunpack.c.h.b16 %v958
    %v1739 = vunpack.c.l.b16 %v959
    %v1740 = vunpack.c.h.b16 %v959
    %v1741 = vunpack.c.l.b16 %v960
    %v1742 = vunpack.c.h.b16 %v960
    %v1743 = vunpack.c.l.b16 %v961
    %v1744 = vunpack.c.h.b16 %v961
    %v1745 = vunpack.c.l.b16 %v962
    %v1746 = vunpack.c.h.b16 %v962
    %v1747 = vunpack.c.l.b16 %v963
    %v1748 = vunpack.c.h.b16 %v963
    %v1749 = vunpack.c.l.b16 %v964
    %v1750 = vunpack.c.h.b16 %v964
    %v1751 = vunpack.c.l.b16 %v965
    %v1752 = vunpack.c.h.b16 %v965
    %v1753 = vunpack.c.l.b16 %v966
    %v1754 = vunpack.c.h.b16 %v966
    %v1755 = vunpack.c.l.b16 %v967
    %v1756 = vunpack.c.h.b16 %v967
    %v1757 = vunpack.c.l.b16 %v968
    %v1758 = vunpack.c.h.b16 %v968
    %v1759 = vunpack.c.l.b16 %v969
    %v1760 = vunpack.c.h.b16 %v969
    %v1761 = vunpack.c.l.b16 %v970
    %v1762 = vunpack.c.h.b16 %v970
    %v1763 = vunpack.c.l.b16 %v971
    %v1764 = vunpack.c.h.b16 %v971
    %v1765 = vunpack.c.l.b16 %v972
    %v1766 = vunpack.c.h.b16 %v972
    %v1767 = vunpack.c.l.b16 %v973
    %v1768 = vunpack.c.h.b16 %v973
    %v1769 = vunpack.c.l.b16 %v974
    %v1770 = vunpack.c.h.b16 %v974
    %v1771 = vunpack.c.l.b16 %v975
    %v1772 = vunpack.c.h.b16 %v975
    %v1773 = vunpack.c.l.b16 %v976
    %v1774 = vunpack.c.h.b16 %v976
    %v1775 = vunpack.c.l.b16 %v977
    %v1776 = vunpack.c.h.b16 %v977
    %v1777 = vunpack.c.l.b16 %v978
    %v1778 = vunpack.c.h.b16 %v978
    %v1779 = vunpack.c.l.b16 %v979
    %v1780 = vunpack.c.h.b16 %v979
    %v1781 = vunpack.c.l.b16 %v980
    %v1782 = vunpack.c.h.b16 %v980
    %v1783 = vunpack.c.l.b16 %v981
    %v1784 = vunpack.c.h.b16 %v981
    %v1785 = vunpack.c.l.b16 %v982
    %v1786 = vunpack.c.h.b16 %v982
    %v1787 = vunpack.c.l.b16 %v983
    %v1788 = vunpack.c.h.b16 %v983
    %v1789 = vunpack.c.l.b16 %v984
    %v1790 = vunpack.c.h.b16 %v984
    %v1791 = vunpack.c.l.b16 %v985
    %v1792 = vunpack.c.h.b16 %v985
    %v1793 = vunpack.c.l.b16 %v986
    %v1794 = vunpack.c.h.b16 %v986
    %v1795 = vunpack.c.l.b16 %v987
    %v1796 = vunpack.c.h.b16 %v987
    %v1797 = vunpack.c.l.b16 %v988
    %v1798 = vunpack.c.h.b16 %v988
    %v1799 = vunpack.c.l.b16 %v989
    %v1800 = vunpack.c.h.b16 %v989
    %v1801 = vunpack.c.l.b16 %v990
    %v1802 = vunpack.c.h.b16 %v990
    %v1803 = vunpack.c.l.b16 %v991
    %v1804 = vunpack.c.h.b16 %v991
    %v1805 = vunpack.c.l.b16 %v992
    %v1806 = vunpack.c.h.b16 %v992
    %v1807 = vunpack.c.l.b16 %v993
    %v1808 = vunpack.c.h.b16 %v993
    %v1809 = vunpack.c.l.b16 %v994
    %v1810 = vunpack.c.h.b16 %v994
    %v1811 = vunpack.c.l.b16 %v995
    %v1812 = vunpack.c.h.b16 %v995
    %v1813 = vunpack.c.l.b16 %v996
    %v1814 = vunpack.c.h.b16 %v996
    %v1815 = vunpack.c.l.b16 %v997
    %v1816 = vunpack.c.h.b16 %v997
    %v1817 = vunpack.c.l.b16 %v998
    %v1818 = vunpack.c.h.b16 %v998
    %v1819 = vunpack.c.l.b16 %v999
    %v1820 = vunpack.c.h.b16 %v999
    %v1821 = vunpack.c.l.b16 %v1000
    %v1822 = vunpack.c.h.b16 %v1000
    %v1823 = vunpack.c.l.b16 %v1001
    %v1824 = vunpack.c.h.b16 %v1001
    %v1825 = vunpack.c.l.b16 %v1002
    %v1826 = vunpack.c.h.b16 %v1002
    %v1827 = vunpack.c.l.b16 %v1003
    %v1828 = vunpack.c.h.b16 %v1003
    %v1829 = vunpack.c.l.b16 %v1004
    %v1830 = vunpack.c.h.b16 %v1004
    %v1831 = vunpack.c.l.b16 %v1005
    %v1832 = vunpack.c.h.b16 %v1005
    %v1833 = vunpack.c.l.b16 %v1006
    %v1834 = vunpack.c.h.b16 %v1006
    %v1835 = vunpack.c.l.b16 %v1007
    %v1836 = vunpack.c.h.b16 %v1007
    %v1837 = vunpack.c.l.b16 %v1008
    %v1838 = vunpack.c.h.b16 %v1008
    %v1839 = vunpack.c.l.b16 %v1009
    %v1840 = vunpack.c.h.b16 %v1009
    %v1841 = vunpack.c.l.b16 %v1010
    %v1842 = vunpack.c.h.b16 %v1010
    %v1843 = vunpack.c.l.b16 %v1011
    %v1844 = vunpack.c.h.b16 %v1011
    %v1845 = vunpack.c.l.b16 %v1012
    %v1846 = vunpack.c.h.b16 %v1012
    %v1847 = vunpack.c.l.b16 %v1013
    %v1848 = vunpack.c.h.b16 %v1013
    %v1849 = vunpack.c.l.b16 %v1014
    %v1850 = vunpack.c.h.b16 %v1014
    %v1851 = vunpack.c.l.b16 %v1015
    %v1852 = vunpack.c.h.b16 %v1015
    %v1853 = vunpack.c.l.b16 %v1016
    %v1854 = vunpack.c.h.b16 %v1016
    %v1855 = vunpack.c.l.b16 %v1017
    %v1856 = vunpack.c.h.b16 %v1017
    %v1857 = vunpack.c.l.b16 %v1018
    %v1858 = vunpack.c.h.b16 %v1018
    %v1859 = vunpack.c.l.b16 %v1019
    %v1860 = vunpack.c.h.b16 %v1019
    %v1861 = vunpack.c.l.b16 %v1020
    %v1862 = vunpack.c.h.b16 %v1020
    %v1863 = vunpack.c.l.b16 %v1021
    %v1864 = vunpack.c.h.b16 %v1021
    %v1865 = vunpack.c.l.b16 %v1022
    %v1866 = vunpack.c.h.b16 %v1022
    %v1867 = vunpack.c.l.b16 %v1023
    %v1868 = vunpack.c.h.b16 %v1023
    %v1869 = vunpack.c.l.b16 %v1024
    %v1870 = vunpack.c.h.b16 %v1024
    %v1871 = vunpack.c.l.b16 %v1025
    %v1872 = vunpack.c.h.b16 %v1025
    %v1873 = vunpack.c.l.b16 %v1026
    %v1874 = vunpack.c.h.b16 %v1026
    %v1875 = vunpack.c.l.b16 %v1027
    %v1876 = vunpack.c.h.b16 %v1027
    %v1877 = vunpack.c.l.b16 %v1028
    %v1878 = vunpack.c.h.b16 %v1028
    %v1879 = vunpack.c.l.b16 %v1029
    %v1880 = vunpack.c.h.b16 %v1029
    %v1881 = vunpack.c.l.b16 %v1030
    %v1882 = vunpack.c.h.b16 %v1030
    %v1883 = vpack.c.b16 %v1387, %v1371
    %v1884 = vpack.c.b16 %v1388, %v1372
    %v1885 = vpack.c.b16 %v1389, %v1373
    %v1886 = vpack.c.b16 %v1390, %v1374
    %v1887 = vpack.c.b16 %v1391, %v1375
    %v1888 = vpack.c.b16 %v1392, %v1376
    %v1889 = vpack.c.b16 %v1393, %v1377
    %v1890 = vpack.c.b16 %v1394, %v1378
    %v1891 = vpack.c.b16 %v1395, %v1379
    %v1892 = vpack.c.b16 %v1396, %v1380
    %v1893 = vpack.c.b16 %v1397, %v1381
    %v1894 = vpack.c.b16 %v1398, %v1382
    %v1895 = vpack.c.b16 %v1399, %v1383
    %v1896 = vpack.c.b16 %v1400, %v1384
    %v1897 = vpack.c.b16 %v1401, %v1385
    %v1898 = vpack.c.b16 %v1402, %v1386
    %v1899 = vpack.c.b16 %v1419, %v1403
    %v1900 = vpack.c.b16 %v1420, %v1404
    %v1901 = vpack.c.b16 %v1421, %v1405
    %v1902 = vpack.c.b16 %v1422, %v1406
    %v1903 = vpack.c.b16 %v1423, %v1407
    %v1904 = vpack.c.b16 %v1424, %v1408
    %v1905 = vpack.c.b16 %v1425, %v1409
    %v1906 = vpack.c.b16 %v1426, %v1410
    %v1907 = vpack.c.b16 %v1427, %v1411
    %v1908 = vpack.c.b16 %v1428, %v1412
    %v1909 = vpack.c.b16 %v1429, %v1413
    %v1910 = vpack.c.b16 %v1430, %v1414
    %v1911 = vpack.c.b16 %v1431, %v1415
    %v1912 = vpack.c.b16 %v1432, %v1416
    %v1913 = vpack.c.b16 %v1433, %v1417
    %v1914 = vpack.c.b16 %v1434, %v1418
    %v1915 = vpack.c.b16 %v1451, %v1435
    %v1916 = vpack.c.b16 %v1452, %v1436
    %v1917 = vpack.c.b16 %v1453, %v1437
    %v1918 = vpack.c.b16 %v1454, %v1438
    %v1919 = vpack.c.b16 %v1455, %v1439
    %v1920 = vpack.c.b16 %v1456, %v1440
    %v1921 = vpack.c.b16 %v1457, %v1441
    %v1922 = vpack.c.b16 %v1458, %v1442
    %v1923 = vpack.c.b16 %v1459, %v1443
    %v1924 = vpack.c.b16 %v1460, %v1444
    %v1925 = vpack.c.b16 %v1461, %v1445
    %v1926 = vpack.c.b16 %v1462, %v1446
    %v1927 = vpack.c.b16 %v1463, %v1447
    %v1928 = vpack.c.b16 %v1464, %v1448
    %v1929 = vpack.c.b16 %v1465, %v1449
    %v1930 = vpack.c.b16 %v1466, %v1450
    %v1931 = vpack.c.b16 %v1483, %v1467
    %v1932 = vpack.c.b16 %v1484, %v1468
    %v1933 = vpack.c.b16 %v1485, %v1469
    %v1934 = vpack.c.b16 %v1486, %v1470
    %v1935 = vpack.c.b16 %v1487, %v1471
    %v1936 = vpack.c.b16 %v1488, %v1472
    %v1937 = vpack.c.b16 %v1489, %v1473
    %v1938 = vpack.c.b16 %v1490, %v1474
    %v1939 = vpack.c.b16 %v1491, %v1475
    %v1940 = vpack.c.b16 %v1492, %v1476
    %v1941 = vpack.c.b16 %v1493, %v1477
    %v1942 = vpack.c.b16 %v1494, %v1478
    %v1943 = vpack.c.b16 %v1495, %v1479
    %v1944 = vpack.c.b16 %v1496, %v1480
    %v1945 = vpack.c.b16 %v1497, %v1481
    %v1946 = vpack.c.b16 %v1498, %v1482
    %v1947 = vpack.c.b16 %v1515, %v1499
    %v1948 = vpack.c.b16 %v1516, %v1500
    %v1949 = vpack.c.b16 %v1517, %v1501
    %v1950 = vpack.c.b16 %v1518, %v1502
    %v1951 = vpack.c.b16 %v1519, %v1503
    %v1952 = vpack.c.b16 %v1520, %v1504
    %v1953 = vpack.c.b16 %v1521, %v1505
    %v1954 = vpack.c.b16 %v1522, %v1506
    %v1955 = vpack.c.b16 %v1523, %v1507
    %v1956 = vpack.c.b16 %v1524, %v1508
    %v1957 = vpack.c.b16 %v1525, %v1509
    %v1958 = vpack.c.b16 %v1526, %v1510
    %v1959 = vpack.c.b16 %v1527, %v1511
    %v1960 = vpack.c.b16 %v1528, %v1512
    %v1961 = vpack.c.b16 %v1529, %v1513
    %v1962 = vpack.c.b16 %v1530, %v1514
    %v1963 = vpack.c.b16 %v1547, %v1531
    %v1964 = vpack.c.b16 %v1548, %v1532
    %v1965 = vpack.c.b16 %v1549, %v1533
    %v1966 = vpack.c.b16 %v1550, %v1534
    %v1967 = vpack.c.b16 %v1551, %v1535
    %v1968 = vpack.c.b16 %v1552, %v1536
    %v1969 = vpack.c.b16 %v1553, %v1537
    %v1970 = vpack.c.b16 %v1554, %v1538
    %v1971 = vpack.c.b16 %v1555, %v1539
    %v1972 = vpack.c.b16 %v1556, %v1540
    %v1973 = vpack.c.b16 %v1557, %v1541
    %v1974 = vpack.c.b16 %v1558, %v1542
    %v1975 = vpack.c.b16 %v1559, %v1543
    %v1976 = vpack.c.b16 %v1560, %v1544
    %v1977 = vpack.c.b16 %v1561, %v1545
    %v1978 = vpack.c.b16 %v1562, %v1546
    %v1979 = vpack.c.b16 %v1579, %v1563
    %v1980 = vpack.c.b16 %v1580, %v1564
    %v1981 = vpack.c.b16 %v1581, %v1565
    %v1982 = vpack.c.b16 %v1582, %v1566
    %v1983 = vpack.c.b16 %v1583, %v1567
    %v1984 = vpack.c.b16 %v1584, %v1568
    %v1985 = vpack.c.b16 %v1585, %v1569
    %v1986 = vpack.c.b16 %v1586, %v1570
    %v1987 = vpack.c.b16 %v1587, %v1571
    %v1988 = vpack.c.b16 %v1588, %v1572
    %v1989 = vpack.c.b16 %v1589, %v1573
    %v1990 = vpack.c.b16 %v1590, %v1574
    %v1991 = vpack.c.b16 %v1591, %v1575
    %v1992 = vpack.c.b16 %v1592, %v1576
    %v1993 = vpack.c.b16 %v1593, %v1577
    %v1994 = vpack.c.b16 %v1594, %v1578
    %v1995 = vpack.c.b16 %v1611, %v1595
    %v1996 = vpack.c.b16 %v1612, %v1596
    %v1997 = vpack.c.b16 %v1613, %v1597
    %v1998 = vpack.c.b16 %v1614, %v1598
    %v1999 = vpack.c.b16 %v1615, %v1599
    %v2000 = vpack.c.b16 %v1616, %v1600
    %v2001 = vpack.c.b16 %v1617, %v1601
    %v2002 = vpack.c.b16 %v1618, %v1602
    %v2003 = vpack.c.b16 %v1619, %v1603
    %v2004 = vpack.c.b16 %v1620, %v1604
    %v2005 = vpack.c.b16 %v1621, %v1605
    %v2006 = vpack.c.b16 %v1622, %v1606
    %v2007 = vpack.c.b16 %v1623, %v1607
    %v2008 = vpack.c.b16 %v1624, %v1608
    %v2009 = vpack.c.b16 %v1625, %v1609
    %v2010 = vpack.c.b16 %v1626, %v1610
    %v2011 = vpack.c.b16 %v1643, %v1627
    %v2012 = vpack.c.b16 %v1644, %v1628
    %v2013 = vpack.c.b16 %v1645, %v1629
    %v2014 = vpack.c.b16 %v1646, %v1630
    %v2015 = vpack.c.b16 %v1647, %v1631
    %v2016 = vpack.c.b16 %v1648, %v1632
    %v2017 = vpack.c.b16 %v1649, %v1633
    %v2018 = vpack.c.b16 %v1650, %v1634
    %v2019 = vpack.c.b16 %v1651, %v1635
    %v2020 = vpack.c.b16 %v1652, %v1636
    %v2021 = vpack.c.b16 %v1653, %v1637
    %v2022 = vpack.c.b16 %v1654, %v1638
    %v2023 = vpack.c.b16 %v1655, %v1639
    %v2024 = vpack.c.b16 %v1656, %v1640
    %v2025 = vpack.c.b16 %v1657, %v1641
    %v2026 = vpack.c.b16 %v1658, %v1642
    %v2027 = vpack.c.b16 %v1675, %v1659
    %v2028 = vpack.c.b16 %v1676, %v1660
    %v2029 = vpack.c.b16 %v1677, %v1661
    %v2030 = vpack.c.b16 %v1678, %v1662
    %v2031 = vpack.c.b16 %v1679, %v1663
    %v2032 = vpack.c.b16 %v1680, %v1664
    %v2033 = vpack.c.b16 %v1681, %v1665
    %v2034 = vpack.c.b16 %v1682, %v1666
    %v2035 = vpack.c.b16 %v1683, %v1667
    %v2036 = vpack.c.b16 %v1684, %v1668
    %v2037 = vpack.c.b16 %v1685, %v1669
    %v2038 = vpack.c.b16 %v1686, %v1670
    %v2039 = vpack.c.b16 %v1687, %v1671
    %v2040 = vpack.c.b16 %v1688, %v1672
    %v2041 = vpack.c.b16 %v1689, %v1673
    %v2042 = vpack.c.b16 %v1690, %v1674
    %v2043 = vpack.c.b16 %v1707, %v1691
    %v2044 = vpack.c.b16 %v1708, %v1692
    %v2045 = vpack.c.b16 %v1709, %v1693
    %v2046 = vpack.c.b16 %v1710, %v1694
    %v2047 = vpack.c.b16 %v1711, %v1695
    %v2048 = vpack.c.b16 %v1712, %v1696
    %v2049 = vpack.c.b16 %v1713, %v1697
    %v2050 = vpack.c.b16 %v1714, %v1698
    %v2051 = vpack.c.b16 %v1715, %v1699
    %v2052 = vpack.c.b16 %v1716, %v1700
    %v2053 = vpack.c.b16 %v1717, %v1701
    %v2054 = vpack.c.b16 %v1718, %v1702
    %v2055 = vpack.c.b16 %v1719, %v1703
    %v2056 = vpack.c.b16 %v1720, %v1704
    %v2057 = vpack.c.b16 %v1721, %v1705
    %v2058 = vpack.c.b16 %v1722, %v1706
    %v2059 = vpack.c.b16 %v1739, %v1723
    %v2060 = vpack.c.b16 %v1740, %v1724
    %v2061 = vpack.c.b16 %v1741, %v1725
    %v2062 = vpack.c.b16 %v1742, %v1726
    %v2063 = vpack.c.b16 %v1743, %v1727
    %v2064 = vpack.c.b16 %v1744, %v1728
    %v2065 = vpack.c.b16 %v1745, %v1729
    %v2066 = vpack.c.b16 %v1746, %v1730
    %v2067 = vpack.c.b16 %v1747, %v1731
    %v2068 = vpack.c.b16 %v1748, %v1732
    %v2069 = vpack.c.b16 %v1749, %v1733
    %v2070 = vpack.c.b16 %v1750, %v1734
    %v2071 = vpack.c.b16 %v1751, %v1735
    %v2072 = vpack.c.b16 %v1752, %v1736
    %v2073 = vpack.c.b16 %v1753, %v1737
    %v2074 = vpack.c.b16 %v1754, %v1738
    %v2075 = vpack.c.b16 %v1771, %v1755
    %v2076 = vpack.c.b16 %v1772, %v1756
    %v2077 = vpack.c.b16 %v1773, %v1757
    %v2078 = vpack.c.b16 %v1774, %v1758
    %v2079 = vpack.c.b16 %v1775, %v1759
    %v2080 = vpack.c.b16 %v1776, %v1760
    %v2081 = vpack.c.b16 %v1777, %v1761
    %v2082 = vpack.c.b16 %v1778, %v1762
    %v2083 = vpack.c.b16 %v1779, %v1763
    %v2084 = vpack.c.b16 %v1780, %v1764
    %v2085 = vpack.c.b16 %v1781, %v1765
    %v2086 = vpack.c.b16 %v1782, %v1766
    %v2087 = vpack.c.b16 %v1783, %v1767
    %v2088 = vpack.c.b16 %v1784, %v1768
    %v2089 = vpack.c.b16 %v1785, %v1769
    %v2090 = vpack.c.b16 %v1786, %v1770
    %v2091 = vpack.c.b16 %v1803, %v1787
    %v2092 = vpack.c.b16 %v1804, %v1788
    %v2093 = vpack.c.b16 %v1805, %v1789
    %v2094 = vpack.c.b16 %v1806, %v1790
    %v2095 = vpack.c.b16 %v1807, %v1791
    %v2096 = vpack.c.b16 %v1808, %v1792
    %v2097 = vpack.c.b16 %v1809, %v1793
    %v2098 = vpack.c.b16 %v1810, %v1794
    %v2099 = vpack.c.b16 %v1811, %v1795
    %v2100 = vpack.c.b16 %v1812, %v1796
    %v2101 = vpack.c.b16 %v1813, %v1797
    %v2102 = vpack.c.b16 %v1814, %v1798
    %v2103 = vpack.c.b16 %v1815, %v1799
    %v2104 = vpack.c.b16 %v1816, %v1800
    %v2105 = vpack.c.b16 %v1817, %v1801
    %v2106 = vpack.c.b16 %v1818, %v1802
    %v2107 = vpack.c.b16 %v1835, %v1819
    %v2108 = vpack.c.b16 %v1836, %v1820
    %v2109 = vpack.c.b16 %v1837, %v1821
    %v2110 = vpack.c.b16 %v1838, %v1822
    %v2111 = vpack.c.b16 %v1839, %v1823
    %v2112 = vpack.c.b16 %v1840, %v1824
    %v2113 = vpack.c.b16 %v1841, %v1825
    %v2114 = vpack.c.b16 %v1842, %v1826
    %v2115 = vpack.c.b16 %v1843, %v1827
    %v2116 = vpack.c.b16 %v1844, %v1828
    %v2117 = vpack.c.b16 %v1845, %v1829
    %v2118 = vpack.c.b16 %v1846, %v1830
    %v2119 = vpack.c.b16 %v1847, %v1831
    %v2120 = vpack.c.b16 %v1848, %v1832
    %v2121 = vpack.c.b16 %v1849, %v1833
    %v2122 = vpack.c.b16 %v1850, %v1834
    %v2123 = vpack.c.b16 %v1867, %v1851
    %v2124 = vpack.c.b16 %v1868, %v1852
    %v2125 = vpack.c.b16 %v1869, %v1853
    %v2126 = vpack.c.b16 %v1870, %v1854
    %v2127 = vpack.c.b16 %v1871, %v1855
    %v2128 = vpack.c.b16 %v1872, %v1856
    %v2129 = vpack.c.b16 %v1873, %v1857
    %v2130 = vpack.c.b16 %v1874, %v1858
    %v2131 = vpack.c.b16 %v1875, %v1859
    %v2132 = vpack.c.b16 %v1876, %v1860
    %v2133 = vpack.c.b16 %v1877, %v1861
    %v2134 = vpack.c.b16 %v1878, %v1862
    %v2135 = vpack.c.b16 %v1879, %v1863
    %v2136 = vpack.c.b16 %v1880, %v1864
    %v2137 = vpack.c.b16 %v1881, %v1865
    %v2138 = vpack.c.b16 %v1882, %v1866
    %2395 = vmatprep.subr.bf16.mxu0 %v1996
    %2396 = vmatpush1.bf16.msra.mxu0 %v1995
    %2397 = vmatprep.subr.bf16.mxu0 %v1980
    %2398 = vmatpush1.bf16.msra.mxu0 %v1979
    %2399 = vmatprep.subr.bf16.mxu0 %v1964
    %2400 = vmatpush1.bf16.msra.mxu0 %v1963
    %2401 = vmatprep.subr.bf16.mxu0 %v1948
    %2402 = vmatpush1.bf16.msra.mxu0 %v1947
    %2403 = vmatprep.subr.bf16.mxu0 %v1932
    %2404 = vmatpush1.bf16.msra.mxu0 %v1931
    %2405 = vmatprep.subr.bf16.mxu0 %v1916
    %2406 = vmatpush1.bf16.msra.mxu0 %v1915
    %2407 = vmatprep.subr.bf16.mxu0 %v1900
    %2408 = vmatpush1.bf16.msra.mxu0 %v1899
    %2409 = vmatprep.subr.bf16.mxu0 %v1884
    %2410 = vmatpush1.bf16.msra.mxu0 %v1883
    %2411 = vmatprep.subr.bf16.mxu0 %v2124
    %2412 = vmatpush2.bf16.msra.mxu0 %v2123
    %2413 = vmatprep.subr.bf16.mxu0 %v2108
    %2414 = vmatpush2.bf16.msra.mxu0 %v2107
    %2415 = vmatprep.subr.bf16.mxu0 %v2092
    %2416 = vmatpush2.bf16.msra.mxu0 %v2091
    %2417 = vmatprep.subr.bf16.mxu0 %v2076
    %2418 = vmatpush2.bf16.msra.mxu0 %v2075
    %2419 = vmatprep.subr.bf16.mxu0 %v2060
    %2420 = vmatpush2.bf16.msra.mxu0 %v2059
    %2421 = vmatprep.subr.bf16.mxu0 %v2044
    %2422 = vmatpush2.bf16.msra.mxu0 %v2043
    %2423 = vmatprep.subr.bf16.mxu0 %v2028
    %2424 = vmatpush2.bf16.msra.mxu0 %v2027
    %2425 = vmatprep.subr.bf16.mxu0 %v2012
    %2426 = vmatpush2.bf16.msra.mxu0 %v2011
    %2427 = vmatprep.mubr.bf16.mxu0 %v774
    %2428 = vmatmul.mubr.bf16.gmra.mxu0 %v773
    %v2429 = vpop.f32.mrf.mxu0
    %v2430 = vadd.f32 %v1038, %v2429
    %v2431 = vpop.f32.mrf.mxu0
    %v2432 = vadd.f32 %v1042, %v2431
    %v2433 = vpop.f32.mrf.mxu0
    %v2434 = vpop.f32.mrf.mxu0
    %2435 = vdwg.mxu0
    %2436 = vmatprep.subr.bf16.mxu0 %v1998
    %2437 = vmatpush1.bf16.msra.mxu0 %v1997
    %2438 = vmatprep.subr.bf16.mxu0 %v1982
    %2439 = vmatpush1.bf16.msra.mxu0 %v1981
    %2440 = vmatprep.subr.bf16.mxu0 %v1966
    %2441 = vmatpush1.bf16.msra.mxu0 %v1965
    %2442 = vmatprep.subr.bf16.mxu0 %v1950
    %2443 = vmatpush1.bf16.msra.mxu0 %v1949
    %2444 = vmatprep.subr.bf16.mxu0 %v1934
    %2445 = vmatpush1.bf16.msra.mxu0 %v1933
    %2446 = vmatprep.subr.bf16.mxu0 %v1918
    %2447 = vmatpush1.bf16.msra.mxu0 %v1917
    %2448 = vmatprep.subr.bf16.mxu0 %v1902
    %2449 = vmatpush1.bf16.msra.mxu0 %v1901
    %2450 = vmatprep.subr.bf16.mxu0 %v1886
    %2451 = vmatpush1.bf16.msra.mxu0 %v1885
    %2452 = vmatprep.subr.bf16.mxu0 %v2126
    %2453 = vmatpush2.bf16.msra.mxu0 %v2125
    %2454 = vmatprep.subr.bf16.mxu0 %v2110
    %2455 = vmatpush2.bf16.msra.mxu0 %v2109
    %2456 = vmatprep.subr.bf16.mxu0 %v2094
    %2457 = vmatpush2.bf16.msra.mxu0 %v2093
    %2458 = vmatprep.subr.bf16.mxu0 %v2078
    %2459 = vmatpush2.bf16.msra.mxu0 %v2077
    %2460 = vmatprep.subr.bf16.mxu0 %v2062
    %2461 = vmatpush2.bf16.msra.mxu0 %v2061
    %2462 = vmatprep.subr.bf16.mxu0 %v2046
    %2463 = vmatpush2.bf16.msra.mxu0 %v2045
    %2464 = vmatprep.subr.bf16.mxu0 %v2030
    %2465 = vmatpush2.bf16.msra.mxu0 %v2029
    %2466 = vmatprep.subr.bf16.mxu0 %v2014
    %2467 = vmatpush2.bf16.msra.mxu0 %v2013
    %2468 = vmatprep.mubr.bf16.mxu0 %v774
    %2469 = vmatmul.mubr.bf16.gmra.mxu0 %v773
    %v2470 = vpop.f32.mrf.mxu0
    %v2471 = vadd.f32 %v1046, %v2470
    %v2472 = vpop.f32.mrf.mxu0
    %v2473 = vadd.f32 %v1050, %v2472
    %v2474 = vpop.f32.mrf.mxu0
    %v2475 = vpop.f32.mrf.mxu0
    %2476 = vdwg.mxu0
    %2477 = vmatprep.subr.bf16.mxu0 %v2000
    %2478 = vmatpush1.bf16.msra.mxu0 %v1999
    %2479 = vmatprep.subr.bf16.mxu0 %v1984
    %2480 = vmatpush1.bf16.msra.mxu0 %v1983
    %2481 = vmatprep.subr.bf16.mxu0 %v1968
    %2482 = vmatpush1.bf16.msra.mxu0 %v1967
    %2483 = vmatprep.subr.bf16.mxu0 %v1952
    %2484 = vmatpush1.bf16.msra.mxu0 %v1951
    %2485 = vmatprep.subr.bf16.mxu0 %v1936
    %2486 = vmatpush1.bf16.msra.mxu0 %v1935
    %2487 = vmatprep.subr.bf16.mxu0 %v1920
    %2488 = vmatpush1.bf16.msra.mxu0 %v1919
    %2489 = vmatprep.subr.bf16.mxu0 %v1904
    %2490 = vmatpush1.bf16.msra.mxu0 %v1903
    %2491 = vmatprep.subr.bf16.mxu0 %v1888
    %2492 = vmatpush1.bf16.msra.mxu0 %v1887
    %2493 = vmatprep.subr.bf16.mxu0 %v2128
    %2494 = vmatpush2.bf16.msra.mxu0 %v2127
    %2495 = vmatprep.subr.bf16.mxu0 %v2112
    %2496 = vmatpush2.bf16.msra.mxu0 %v2111
    %2497 = vmatprep.subr.bf16.mxu0 %v2096
    %2498 = vmatpush2.bf16.msra.mxu0 %v2095
    %2499 = vmatprep.subr.bf16.mxu0 %v2080
    %2500 = vmatpush2.bf16.msra.mxu0 %v2079
    %2501 = vmatprep.subr.bf16.mxu0 %v2064
    %2502 = vmatpush2.bf16.msra.mxu0 %v2063
    %2503 = vmatprep.subr.bf16.mxu0 %v2048
    %2504 = vmatpush2.bf16.msra.mxu0 %v2047
    %2505 = vmatprep.subr.bf16.mxu0 %v2032
    %2506 = vmatpush2.bf16.msra.mxu0 %v2031
    %2507 = vmatprep.subr.bf16.mxu0 %v2016
    %2508 = vmatpush2.bf16.msra.mxu0 %v2015
    %2509 = vmatprep.mubr.bf16.mxu0 %v774
    %2510 = vmatmul.mubr.bf16.gmra.mxu0 %v773
    %v2511 = vpop.f32.mrf.mxu0
    %v2512 = vadd.f32 %v1054, %v2511
    %v2513 = vpop.f32.mrf.mxu0
    %v2514 = vadd.f32 %v1058, %v2513
    %v2515 = vpop.f32.mrf.mxu0
    %v2516 = vpop.f32.mrf.mxu0
    %2517 = vdwg.mxu0
    %2518 = vmatprep.subr.bf16.mxu0 %v2002
    %2519 = vmatpush1.bf16.msra.mxu0 %v2001
    %2520 = vmatprep.subr.bf16.mxu0 %v1986
    %2521 = vmatpush1.bf16.msra.mxu0 %v1985
    %2522 = vmatprep.subr.bf16.mxu0 %v1970
    %2523 = vmatpush1.bf16.msra.mxu0 %v1969
    %2524 = vmatprep.subr.bf16.mxu0 %v1954
    %2525 = vmatpush1.bf16.msra.mxu0 %v1953
    %2526 = vmatprep.subr.bf16.mxu0 %v1938
    %2527 = vmatpush1.bf16.msra.mxu0 %v1937
    %2528 = vmatprep.subr.bf16.mxu0 %v1922
    %2529 = vmatpush1.bf16.msra.mxu0 %v1921
    %2530 = vmatprep.subr.bf16.mxu0 %v1906
    %2531 = vmatpush1.bf16.msra.mxu0 %v1905
    %2532 = vmatprep.subr.bf16.mxu0 %v1890
    %2533 = vmatpush1.bf16.msra.mxu0 %v1889
    %2534 = vmatprep.subr.bf16.mxu0 %v2130
    %2535 = vmatpush2.bf16.msra.mxu0 %v2129
    %2536 = vmatprep.subr.bf16.mxu0 %v2114
    %2537 = vmatpush2.bf16.msra.mxu0 %v2113
    %2538 = vmatprep.subr.bf16.mxu0 %v2098
    %2539 = vmatpush2.bf16.msra.mxu0 %v2097
    %2540 = vmatprep.subr.bf16.mxu0 %v2082
    %2541 = vmatpush2.bf16.msra.mxu0 %v2081
    %2542 = vmatprep.subr.bf16.mxu0 %v2066
    %2543 = vmatpush2.bf16.msra.mxu0 %v2065
    %2544 = vmatprep.subr.bf16.mxu0 %v2050
    %2545 = vmatpush2.bf16.msra.mxu0 %v2049
    %2546 = vmatprep.subr.bf16.mxu0 %v2034
    %2547 = vmatpush2.bf16.msra.mxu0 %v2033
    %2548 = vmatprep.subr.bf16.mxu0 %v2018
    %2549 = vmatpush2.bf16.msra.mxu0 %v2017
    %2550 = vmatprep.mubr.bf16.mxu0 %v774
    %2551 = vmatmul.mubr.bf16.gmra.mxu0 %v773
    %v2552 = vpop.f32.mrf.mxu0
    %v2553 = vadd.f32 %v1062, %v2552
    %v2554 = vpop.f32.mrf.mxu0
    %v2555 = vadd.f32 %v1066, %v2554
    %v2556 = vpop.f32.mrf.mxu0
    %v2557 = vpop.f32.mrf.mxu0
    %2558 = vdwg.mxu0
    %2559 = vmatprep.subr.bf16.mxu0 %v2004
    %2560 = vmatpush1.bf16.msra.mxu0 %v2003
    %2561 = vmatprep.subr.bf16.mxu0 %v1988
    %2562 = vmatpush1.bf16.msra.mxu0 %v1987
    %2563 = vmatprep.subr.bf16.mxu0 %v1972
    %2564 = vmatpush1.bf16.msra.mxu0 %v1971
    %2565 = vmatprep.subr.bf16.mxu0 %v1956
    %2566 = vmatpush1.bf16.msra.mxu0 %v1955
    %2567 = vmatprep.subr.bf16.mxu0 %v1940
    %2568 = vmatpush1.bf16.msra.mxu0 %v1939
    %2569 = vmatprep.subr.bf16.mxu0 %v1924
    %2570 = vmatpush1.bf16.msra.mxu0 %v1923
    %2571 = vmatprep.subr.bf16.mxu0 %v1908
    %2572 = vmatpush1.bf16.msra.mxu0 %v1907
    %2573 = vmatprep.subr.bf16.mxu0 %v1892
    %2574 = vmatpush1.bf16.msra.mxu0 %v1891
    %2575 = vmatprep.subr.bf16.mxu0 %v2132
    %2576 = vmatpush2.bf16.msra.mxu0 %v2131
    %2577 = vmatprep.subr.bf16.mxu0 %v2116
    %2578 = vmatpush2.bf16.msra.mxu0 %v2115
    %2579 = vmatprep.subr.bf16.mxu0 %v2100
    %2580 = vmatpush2.bf16.msra.mxu0 %v2099
    %2581 = vmatprep.subr.bf16.mxu0 %v2084
    %2582 = vmatpush2.bf16.msra.mxu0 %v2083
    %2583 = vmatprep.subr.bf16.mxu0 %v2068
    %2584 = vmatpush2.bf16.msra.mxu0 %v2067
    %2585 = vmatprep.subr.bf16.mxu0 %v2052
    %2586 = vmatpush2.bf16.msra.mxu0 %v2051
    %2587 = vmatprep.subr.bf16.mxu0 %v2036
    %2588 = vmatpush2.bf16.msra.mxu0 %v2035
    %2589 = vmatprep.subr.bf16.mxu0 %v2020
    %2590 = vmatpush2.bf16.msra.mxu0 %v2019
    %2591 = vmatprep.mubr.bf16.mxu0 %v774
    %2592 = vmatmul.mubr.bf16.gmra.mxu0 %v773
    %v2593 = vpop.f32.mrf.mxu0
    %v2594 = vadd.f32 %v1070, %v2593
    %v2595 = vpop.f32.mrf.mxu0
    %v2596 = vadd.f32 %v1074, %v2595
    %v2597 = vpop.f32.mrf.mxu0
    %v2598 = vpop.f32.mrf.mxu0
    %2599 = vdwg.mxu0
    %2600 = vmatprep.subr.bf16.mxu0 %v2006
    %2601 = vmatpush1.bf16.msra.mxu0 %v2005
    %2602 = vmatprep.subr.bf16.mxu0 %v1990
    %2603 = vmatpush1.bf16.msra.mxu0 %v1989
    %2604 = vmatprep.subr.bf16.mxu0 %v1974
    %2605 = vmatpush1.bf16.msra.mxu0 %v1973
    %2606 = vmatprep.subr.bf16.mxu0 %v1958
    %2607 = vmatpush1.bf16.msra.mxu0 %v1957
    %2608 = vmatprep.subr.bf16.mxu0 %v1942
    %2609 = vmatpush1.bf16.msra.mxu0 %v1941
    %2610 = vmatprep.subr.bf16.mxu0 %v1926
    %2611 = vmatpush1.bf16.msra.mxu0 %v1925
    %2612 = vmatprep.subr.bf16.mxu0 %v1910
    %2613 = vmatpush1.bf16.msra.mxu0 %v1909
    %2614 = vmatprep.subr.bf16.mxu0 %v1894
    %2615 = vmatpush1.bf16.msra.mxu0 %v1893
    %2616 = vmatprep.subr.bf16.mxu0 %v2134
    %2617 = vmatpush2.bf16.msra.mxu0 %v2133
    %2618 = vmatprep.subr.bf16.mxu0 %v2118
    %2619 = vmatpush2.bf16.msra.mxu0 %v2117
    %2620 = vmatprep.subr.bf16.mxu0 %v2102
    %2621 = vmatpush2.bf16.msra.mxu0 %v2101
    %2622 = vmatprep.subr.bf16.mxu0 %v2086
    %2623 = vmatpush2.bf16.msra.mxu0 %v2085
    %2624 = vmatprep.subr.bf16.mxu0 %v2070
    %2625 = vmatpush2.bf16.msra.mxu0 %v2069
    %2626 = vmatprep.subr.bf16.mxu0 %v2054
    %2627 = vmatpush2.bf16.msra.mxu0 %v2053
    %2628 = vmatprep.subr.bf16.mxu0 %v2038
    %2629 = vmatpush2.bf16.msra.mxu0 %v2037
    %2630 = vmatprep.subr.bf16.mxu0 %v2022
    %2631 = vmatpush2.bf16.msra.mxu0 %v2021
    %2632 = vmatprep.mubr.bf16.mxu0 %v774
    %2633 = vmatmul.mubr.bf16.gmra.mxu0 %v773
    %v2634 = vpop.f32.mrf.mxu0
    %v2635 = vadd.f32 %v1078, %v2634
    %v2636 = vpop.f32.mrf.mxu0
    %v2637 = vadd.f32 %v1082, %v2636
    %v2638 = vpop.f32.mrf.mxu0
    %v2639 = vpop.f32.mrf.mxu0
    %2640 = vdwg.mxu0
    %2641 = vmatprep.subr.bf16.mxu0 %v2008
    %2642 = vmatpush1.bf16.msra.mxu0 %v2007
    %2643 = vmatprep.subr.bf16.mxu0 %v1992
    %2644 = vmatpush1.bf16.msra.mxu0 %v1991
    %2645 = vmatprep.subr.bf16.mxu0 %v1976
    %2646 = vmatpush1.bf16.msra.mxu0 %v1975
    %2647 = vmatprep.subr.bf16.mxu0 %v1960
    %2648 = vmatpush1.bf16.msra.mxu0 %v1959
    %2649 = vmatprep.subr.bf16.mxu0 %v1944
    %2650 = vmatpush1.bf16.msra.mxu0 %v1943
    %2651 = vmatprep.subr.bf16.mxu0 %v1928
    %2652 = vmatpush1.bf16.msra.mxu0 %v1927
    %2653 = vmatprep.subr.bf16.mxu0 %v1912
    %2654 = vmatpush1.bf16.msra.mxu0 %v1911
    %2655 = vmatprep.subr.bf16.mxu0 %v1896
    %2656 = vmatpush1.bf16.msra.mxu0 %v1895
    %2657 = vmatprep.subr.bf16.mxu0 %v2136
    %2658 = vmatpush2.bf16.msra.mxu0 %v2135
    %2659 = vmatprep.subr.bf16.mxu0 %v2120
    %2660 = vmatpush2.bf16.msra.mxu0 %v2119
    %2661 = vmatprep.subr.bf16.mxu0 %v2104
    %2662 = vmatpush2.bf16.msra.mxu0 %v2103
    %2663 = vmatprep.subr.bf16.mxu0 %v2088
    %2664 = vmatpush2.bf16.msra.mxu0 %v2087
    %2665 = vmatprep.subr.bf16.mxu0 %v2072
    %2666 = vmatpush2.bf16.msra.mxu0 %v2071
    %2667 = vmatprep.subr.bf16.mxu0 %v2056
    %2668 = vmatpush2.bf16.msra.mxu0 %v2055
    %2669 = vmatprep.subr.bf16.mxu0 %v2040
    %2670 = vmatpush2.bf16.msra.mxu0 %v2039
    %2671 = vmatprep.subr.bf16.mxu0 %v2024
    %2672 = vmatpush2.bf16.msra.mxu0 %v2023
    %2673 = vmatprep.mubr.bf16.mxu0 %v774
    %2674 = vmatmul.mubr.bf16.gmra.mxu0 %v773
    %v2675 = vpop.f32.mrf.mxu0
    %v2676 = vadd.f32 %v1086, %v2675
    %v2677 = vpop.f32.mrf.mxu0
    %v2678 = vadd.f32 %v1090, %v2677
    %v2679 = vpop.f32.mrf.mxu0
    %v2680 = vpop.f32.mrf.mxu0
    %2681 = vdwg.mxu0
    %2682 = vmatprep.subr.bf16.mxu0 %v2010
    %2683 = vmatpush1.bf16.msra.mxu0 %v2009
    %2684 = vmatprep.subr.bf16.mxu0 %v1994
    %2685 = vmatpush1.bf16.msra.mxu0 %v1993
    %2686 = vmatprep.subr.bf16.mxu0 %v1978
    %2687 = vmatpush1.bf16.msra.mxu0 %v1977
    %2688 = vmatprep.subr.bf16.mxu0 %v1962
    %2689 = vmatpush1.bf16.msra.mxu0 %v1961
    %2690 = vmatprep.subr.bf16.mxu0 %v1946
    %2691 = vmatpush1.bf16.msra.mxu0 %v1945
    %2692 = vmatprep.subr.bf16.mxu0 %v1930
    %2693 = vmatpush1.bf16.msra.mxu0 %v1929
    %2694 = vmatprep.subr.bf16.mxu0 %v1914
    %2695 = vmatpush1.bf16.msra.mxu0 %v1913
    %2696 = vmatprep.subr.bf16.mxu0 %v1898
    %2697 = vmatpush1.bf16.msra.mxu0 %v1897
    %2698 = vmatprep.subr.bf16.mxu0 %v2138
    %2699 = vmatpush2.bf16.msra.mxu0 %v2137
    %2700 = vmatprep.subr.bf16.mxu0 %v2122
    %2701 = vmatpush2.bf16.msra.mxu0 %v2121
    %2702 = vmatprep.subr.bf16.mxu0 %v2106
    %2703 = vmatpush2.bf16.msra.mxu0 %v2105
    %2704 = vmatprep.subr.bf16.mxu0 %v2090
    %2705 = vmatpush2.bf16.msra.mxu0 %v2089
    %2706 = vmatprep.subr.bf16.mxu0 %v2074
    %2707 = vmatpush2.bf16.msra.mxu0 %v2073
    %2708 = vmatprep.subr.bf16.mxu0 %v2058
    %2709 = vmatpush2.bf16.msra.mxu0 %v2057
    %2710 = vmatprep.subr.bf16.mxu0 %v2042
    %2711 = vmatpush2.bf16.msra.mxu0 %v2041
    %2712 = vmatprep.subr.bf16.mxu0 %v2026
    %2713 = vmatpush2.bf16.msra.mxu0 %v2025
    %2714 = vmatprep.mubr.bf16.mxu0 %v774
    %2715 = vmatmul.mubr.bf16.gmra.mxu0 %v773
    %v2716 = vpop.f32.mrf.mxu0
    %v2717 = vadd.f32 %v1094, %v2716
    %v2718 = vpop.f32.mrf.mxu0
    %v2719 = vadd.f32 %v1098, %v2718
    %v2720 = vpop.f32.mrf.mxu0
    %v2721 = vpop.f32.mrf.mxu0
    %2722 = vdwg.mxu0
    %v2739 = vcombine.low %v2430, %v2432
    %v2740 = vcombine.low %v2471, %v2473
    %v2742 = vunpack.c.l.s4 1983009808
    %v2743 = vunpack.c.0.s8 %v2742
    %v2744 = vlaneseq
    %v2745 = vshrl.u32 %v2744, 7
    %v2746 = vsub.s32 %v2743, %v2745
    %v2747 = vrot.slane %v2739, %v2746
    %v2749 = vunpack.c.l.s4 1983009808
    %v2750 = vunpack.c.0.s8 %v2749
    %v2751 = vlaneseq
    %v2752 = vshrl.u32 %v2751, 7
    %v2753 = vsub.s32 %v2750, %v2752
    %v2754 = vrot.slane %v2740, %v2753
    %v2755 = vcombine.low %v2747, %v2754
    %v2756 = vcombine.low %v2512, %v2514
    %v2757 = vcombine.low %v2553, %v2555
    %v2759 = vunpack.c.l.s4 1983009808
    %v2760 = vunpack.c.0.s8 %v2759
    %v2761 = vlaneseq
    %v2762 = vshrl.u32 %v2761, 7
    %v2763 = vsub.s32 %v2760, %v2762
    %v2764 = vrot.slane %v2756, %v2763
    %v2766 = vunpack.c.l.s4 1983009808
    %v2767 = vunpack.c.0.s8 %v2766
    %v2768 = vlaneseq
    %v2769 = vshrl.u32 %v2768, 7
    %v2770 = vsub.s32 %v2767, %v2769
    %v2771 = vrot.slane %v2757, %v2770
    %v2772 = vcombine.low %v2764, %v2771
    %v2773 = vcombine.low %v2594, %v2596
    %v2774 = vcombine.low %v2635, %v2637
    %v2776 = vunpack.c.l.s4 1983009808
    %v2777 = vunpack.c.0.s8 %v2776
    %v2778 = vlaneseq
    %v2779 = vshrl.u32 %v2778, 7
    %v2780 = vsub.s32 %v2777, %v2779
    %v2781 = vrot.slane %v2773, %v2780
    %v2783 = vunpack.c.l.s4 1983009808
    %v2784 = vunpack.c.0.s8 %v2783
    %v2785 = vlaneseq
    %v2786 = vshrl.u32 %v2785, 7
    %v2787 = vsub.s32 %v2784, %v2786
    %v2788 = vrot.slane %v2774, %v2787
    %v2789 = vcombine.low %v2781, %v2788
    %v2790 = vcombine.low %v2676, %v2678
    %v2791 = vcombine.low %v2717, %v2719
    %v2793 = vunpack.c.l.s4 1983009808
    %v2794 = vunpack.c.0.s8 %v2793
    %v2795 = vlaneseq
    %v2796 = vshrl.u32 %v2795, 7
    %v2797 = vsub.s32 %v2794, %v2796
    %v2798 = vrot.slane %v2790, %v2797
    %v2800 = vunpack.c.l.s4 1983009808
    %v2801 = vunpack.c.0.s8 %v2800
    %v2802 = vlaneseq
    %v2803 = vshrl.u32 %v2802, 7
    %v2804 = vsub.s32 %v2801, %v2803
    %v2805 = vrot.slane %v2791, %v2804
    %v2806 = vcombine.low %v2798, %v2805
    %2811 = vst [vmem:[#allocation2] sm:$0xff] %v2755
    %2812 = vst [vmem:[#allocation2 + $0x8] sm:$0xff] %v2772
    %2813 = vst [vmem:[#allocation2 + $0x10] sm:$0xff] %v2789
    %2814 = vst [vmem:[#allocation2 + $0x18] sm:$0xff] %v2806
    // Predicated region
    $region22: #{style_predict_head.1} parent=1 // pred_check
      _
    $region23: #{style_predict_head.1} parent=1 // pred_check_branch
      %2816 = sbr.rel (0) target = $region25
    $region24: #{style_predict_head.1} parent=1 // pred_region
      %s2818 = ssub.s32 512, 512
      %2819 = vsyncadd [#allocation3], %s2818
      %s2821 = sshll.u32 [#allocation2], 4
      %s2822 = int_to_ptr.vmem [resolvable:$true] %s2821
      %2824 = dma.vmem_to_hbm [thread:$0]  %s2822, 512, %s5, [#allocation3]
    $region25: #{style_predict_head.1} parent=1 // pred_fallthru
      _
    // Predicated region
    $region26: #{style_predict_head.1} parent=1 // pred_check
      _
    $region27: #{style_predict_head.1} parent=1 // pred_check_branch
      %2826 = sbr.rel (0) target = $region29
    $region28: #{style_predict_head.1} parent=1 // pred_region
      %2827 = dma.done [#allocation3], 512
    $region29: #{style_predict_head.1} parent=1 // pred_fallthru
      _
    %2828 = vsyncpa [#allocation3], 1

</llo_original>
